<compile_context>
chip_gen: v7x
topology: tpu7x:2x2x1
jax: 0.10.0
libtpu: 0.0.40
codegen_flags: <defaults>
</compile_context>

<pallas_src>
import jax
import jax.numpy as jnp
from jax import lax
from jax.experimental import pallas as pl
from jax.experimental.pallas import tpu as pltpu


def lstm_fc_kernel(x2d_ref, wih_ref, whh_ref, b_ref, wfc_ref, bfc_ref,
                   out_ref, xproj_ref):
    """Whole-sequence LSTM + final Linear, single invocation.

    x2d_ref  : (T*B, I)    time-major, flattened input (f32)
    wih_ref  : (I, 4H)     f32, g-gate columns pre-scaled by 2
    whh_ref  : (H, 4H)     f32, g-gate columns pre-scaled by 2
    b_ref    : (1, 4H)     f32 (b_ih + b_hh), g-gate columns pre-scaled by 2
    wfc_ref  : (H, O)      f32
    bfc_ref  : (1, O)      f32
    out_ref  : (B, O)      f32
    xproj_ref: (T*B, 4H)   f32 scratch -- hoisted input projection (flat slab)
    """
    TB, G = xproj_ref.shape
    H = whh_ref.shape[0]
    B = out_ref.shape[0]
    T = TB // B

    # --- prologue: input projection + bias for ALL time steps, one MXU call ---
    xproj_ref[...] = (
        jnp.dot(x2d_ref[...], wih_ref[...], preferred_element_type=jnp.float32)
        + b_ref[...]
    )

    h = jnp.zeros((B, H), jnp.float32)
    c = jnp.zeros((B, H), jnp.float32)

    # --- serial recurrence (fully unrolled, static slices into the flat slab);
    #     only h @ W_hh^T is on the critical path per step ---
    for t in range(T):
        gates = xproj_ref[t * B:(t + 1) * B, :] + jnp.dot(
            h, whh_ref[...], preferred_element_type=jnp.float32)    # (B, 4H)

        # Single sigmoid pass over the whole (B, 4H) slab (EUP).  The g-gate
        # pre-activation was pre-scaled by 2, so tanh(x) = 2*sigmoid(2x) - 1.
        sg = jax.nn.sigmoid(gates)
        i_g = sg[:, 0 * H:1 * H]
        f_g = sg[:, 1 * H:2 * H]
        g_g = 2.0 * sg[:, 2 * H:3 * H] - 1.0
        o_g = sg[:, 3 * H:4 * H]

        c = f_g * c + i_g * g_g
        h = o_g * jnp.tanh(c)

    # --- epilogue: fused Linear on the last hidden state ---
    out_ref[...] = (
        jnp.dot(h, wfc_ref[...], preferred_element_type=jnp.float32)
        + bfc_ref[...]
    ).astype(out_ref.dtype)


@jax.jit
def lstm_model_forward(x, wih_t, whh_t, b, wfc_t, bfc):
    """x: (B, T, I) float32 (batch_first, like PyTorch).  Returns (B, O) f32."""
    B, T, I = x.shape
    H = whh_t.shape[0]
    O = wfc_t.shape[1]

    # Pad batch to the f32 sublane count (8): same vreg/MXU occupancy either way.
    B_pad = ((B + 7) // 8) * 8
    if B_pad != B:
        x = jnp.pad(x, ((0, B_pad - B), (0, 0), (0, 0)))

    # Time-major and flattened so the input projection is a single MXU call.
    x2d = jnp.transpose(x, (1, 0, 2)).reshape(T * B_pad, I)

    # Fold the 2x scale for tanh(x) = 2*sigmoid(2x) - 1 into the g-gate
    # columns of the pre-activation (wrapper-side; constant-folded by XLA).
    g_scale = jnp.ones((1, 4 * H), jnp.float32).at[:, 2 * H:3 * H].set(2.0)
    wih_s = wih_t * g_scale
    whh_s = whh_t * g_scale
    b_s = b * g_scale

    flops = (2 * T * B_pad * I * 4 * H                       # input projection
             + T * (2 * B_pad * H * 4 * H + 8 * B_pad * H)   # recurrence
             + 2 * B_pad * H * O)                            # FC epilogue
    transcendentals = T * (B_pad * 4 * H + B_pad * H)
    bytes_accessed = 4 * (x2d.size + wih_s.size + whh_s.size + b_s.size
                          + wfc_t.size + bfc.size + B_pad * O)

    out = pl.pallas_call(
        lstm_fc_kernel,
        out_shape=jax.ShapeDtypeStruct((B_pad, O), jnp.float32),
        in_specs=[pl.BlockSpec(memory_space=pltpu.MemorySpace.VMEM)] * 6,
        out_specs=pl.BlockSpec(memory_space=pltpu.MemorySpace.VMEM),
        scratch_shapes=[pltpu.VMEM((T * B_pad, 4 * H), jnp.float32)],
        cost_estimate=pl.CostEstimate(
            flops=flops, transcendentals=transcendentals,
            bytes_accessed=bytes_accessed),
    )(x2d, wih_s, whh_s, b_s, wfc_t, bfc)
    return out[:B]


def init_params(key, input_size=6, hidden_size=64, output_size=6):
    """Deterministic synthetic params, PyTorch-style U(-1/sqrt(H), 1/sqrt(H))."""
    k = 1.0 / jnp.sqrt(jnp.float32(hidden_size))
    keys = jax.random.split(key, 6)
    w_ih = jax.random.uniform(keys[0], (4 * hidden_size, input_size), jnp.float32, -k, k)
    w_hh = jax.random.uniform(keys[1], (4 * hidden_size, hidden_size), jnp.float32, -k, k)
    b_ih = jax.random.uniform(keys[2], (4 * hidden_size,), jnp.float32, -k, k)
    b_hh = jax.random.uniform(keys[3], (4 * hidden_size,), jnp.float32, -k, k)
    w_fc = jax.random.uniform(keys[4], (output_size, hidden_size), jnp.float32, -k, k)
    b_fc = jax.random.uniform(keys[5], (output_size,), jnp.float32, -k, k)

    # Pre-transpose for right-multiplication inside the kernel.
    wih_t = w_ih.T                                   # (I, 4H)
    whh_t = w_hh.T                                   # (H, 4H)
    b = (b_ih + b_hh).reshape(1, 4 * hidden_size)    # (1, 4H)
    wfc_t = w_fc.T                                   # (H, O)
    bfc = b_fc.reshape(1, output_size)               # (1, O)
    return wih_t, whh_t, b, wfc_t, bfc


def reference_forward(x, wih_t, whh_t, b, wfc_t, bfc):
    """Pure-JAX f32 reference matching torch.nn.LSTM + Linear semantics."""
    B, T, I = x.shape
    H = whh_t.shape[0]
    hp = lax.Precision.HIGHEST

    def step(carry, x_t):
        h, c = carry
        gates = (jnp.dot(x_t, wih_t, precision=hp)
                 + jnp.dot(h, whh_t, precision=hp) + b)
        i_g = jax.nn.sigmoid(gates[:, 0 * H:1 * H])
        f_g = jax.nn.sigmoid(gates[:, 1 * H:2 * H])
        g_g = jnp.tanh(gates[:, 2 * H:3 * H])
        o_g = jax.nn.sigmoid(gates[:, 3 * H:4 * H])
        c_new = f_g * c + i_g * g_g
        h_new = o_g * jnp.tanh(c_new)
        return (h_new, c_new), None

    h0 = jnp.zeros((B, H), jnp.float32)
    c0 = jnp.zeros((B, H), jnp.float32)
    (h_last, _), _ = lax.scan(step, (h0, c0), jnp.transpose(x, (1, 0, 2)))
    return jnp.dot(h_last, wfc_t, precision=hp) + bfc


if __name__ == "__main__":
    INPUT_SIZE, HIDDEN_SIZE, OUTPUT_SIZE = 6, 64, 6
    BATCH, SEQ_LEN = 2, 8

    root = jax.random.PRNGKey(0)
    k_x, k_p = jax.random.split(root)

    x = jax.random.normal(k_x, (BATCH, SEQ_LEN, INPUT_SIZE), jnp.float32)
    params = init_params(k_p, INPUT_SIZE, HIDDEN_SIZE, OUTPUT_SIZE)

    out = jax.block_until_ready(lstm_model_forward(x, *params))

    ref = reference_forward(x, *params)
    assert out.shape == (BATCH, OUTPUT_SIZE), out.shape
    # Everything is f32 end-to-end (tanh recovered exactly as 2*sigmoid(2x)-1),
    # so only rounding-level differences vs. the HIGHEST-precision reference.
    max_err = jnp.max(jnp.abs(out - ref))
    assert jnp.allclose(out, ref, atol=1e-3, rtol=1e-3), f"max abs err {max_err}"

    print("KERNEL_OK")
</pallas_src>

<mosaic_0001>
module attributes {stable_mosaic.version = 11 : i64} {
  func.func @lstm_fc_kernel(%arg0: memref<64x6xf32, #tpu.memory_space<vmem>>, %arg1: memref<6x256xf32, #tpu.memory_space<vmem>>, %arg2: memref<64x256xf32, #tpu.memory_space<vmem>>, %arg3: memref<1x256xf32, #tpu.memory_space<vmem>>, %arg4: memref<64x6xf32, #tpu.memory_space<vmem>>, %arg5: memref<1x6xf32, #tpu.memory_space<vmem>>, %arg6: memref<8x6xf32, #tpu.memory_space<vmem>>, %arg7: memref<64x256xf32, #tpu.memory_space<vmem>>) attributes {dimension_semantics = [], scalar_prefetch = 0 : i64, scratch_operands = 1 : i64, tpu.core_type = #tpu.core_type<tc>} {
    %c0 = arith.constant 0 : index
    %c0_0 = arith.constant 0 : index
    %0 = vector.load %arg0[%c0, %c0_0] : memref<64x6xf32, #tpu.memory_space<vmem>>, vector<64x6xf32>
    %c0_1 = arith.constant 0 : index
    %c0_2 = arith.constant 0 : index
    %1 = vector.load %arg1[%c0_1, %c0_2] : memref<6x256xf32, #tpu.memory_space<vmem>>, vector<6x256xf32>
    %cst = arith.constant dense<0.000000e+00> : vector<64x256xf32>
    %2 = tpu.matmul %0, %1, %cst {dimension_numbers = #tpu.dot_dimension_numbers<[1], [0], [0], [1], [0, 0, 1, 1], [], []>} : vector<64x6xf32>, vector<6x256xf32>, vector<64x256xf32> -> vector<64x256xf32>
    %c0_3 = arith.constant 0 : index
    %c0_4 = arith.constant 0 : index
    %3 = vector.load %arg3[%c0_3, %c0_4] : memref<1x256xf32, #tpu.memory_space<vmem>>, vector<1x256xf32>
    %4 = vector.broadcast %3 : vector<1x256xf32> to vector<64x256xf32>
    %5 = arith.addf %2, %4 : vector<64x256xf32>
    %c0_5 = arith.constant 0 : index
    %c0_6 = arith.constant 0 : index
    %6 = vector.load %arg7[%c0_5, %c0_6] : memref<64x256xf32, #tpu.memory_space<vmem>>, vector<64x256xf32>
    tpu.vector_store %arg7[%c0_5, %c0_6], %5 {strides = array<i32>} : memref<64x256xf32, #tpu.memory_space<vmem>>, vector<64x256xf32>,
    %cst_7 = arith.constant 0.000000e+00 : f32
    %7 = vector.broadcast %cst_7 : f32 to vector<8x64xf32>
    %cst_8 = arith.constant 0.000000e+00 : f32
    %8 = vector.broadcast %cst_8 : f32 to vector<8x64xf32>
    %c0_9 = arith.constant 0 : index
    %c0_10 = arith.constant 0 : index
    %9 = vector.load %arg7[%c0_9, %c0_10] : memref<64x256xf32, #tpu.memory_space<vmem>>, vector<8x256xf32>
    %c0_11 = arith.constant 0 : index
    %c0_12 = arith.constant 0 : index
    %10 = vector.load %arg2[%c0_11, %c0_12] : memref<64x256xf32, #tpu.memory_space<vmem>>, vector<64x256xf32>
    %cst_13 = arith.constant dense<0.000000e+00> : vector<8x256xf32>
    %11 = tpu.matmul %7, %10, %cst_13 {dimension_numbers = #tpu.dot_dimension_numbers<[1], [0], [0], [1], [0, 0, 1, 1], [], []>} : vector<8x64xf32>, vector<64x256xf32>, vector<8x256xf32> -> vector<8x256xf32>
    %12 = arith.addf %9, %11 : vector<8x256xf32>
    %13 = arith.negf %12 : vector<8x256xf32>
    %14 = math.exp %13 : vector<8x256xf32>
    %cst_14 = arith.constant 1.000000e+00 : f32
    %15 = vector.broadcast %cst_14 : f32 to vector<8x256xf32>
    %16 = arith.addf %15, %14 : vector<8x256xf32>
    %17 = arith.divf %15, %16 : vector<8x256xf32>
    %18 = vector.extract_strided_slice %17 {offsets = [0, 0], sizes = [8, 64], strides = [1, 1]} : vector<8x256xf32> to vector<8x64xf32>
    %19 = vector.extract_strided_slice %17 {offsets = [0, 64], sizes = [8, 64], strides = [1, 1]} : vector<8x256xf32> to vector<8x64xf32>
    %20 = vector.extract_strided_slice %17 {offsets = [0, 128], sizes = [8, 64], strides = [1, 1]} : vector<8x256xf32> to vector<8x64xf32>
    %cst_15 = arith.constant 2.000000e+00 : f32
    %21 = vector.broadcast %cst_15 : f32 to vector<8x64xf32>
    %22 = arith.mulf %21, %20 : vector<8x64xf32>
    %cst_16 = arith.constant 1.000000e+00 : f32
    %23 = vector.broadcast %cst_16 : f32 to vector<8x64xf32>
    %24 = arith.subf %22, %23 : vector<8x64xf32>
    %25 = vector.extract_strided_slice %17 {offsets = [0, 192], sizes = [8, 64], strides = [1, 1]} : vector<8x256xf32> to vector<8x64xf32>
    %26 = arith.mulf %19, %8 : vector<8x64xf32>
    %27 = arith.mulf %18, %24 : vector<8x64xf32>
    %28 = arith.addf %26, %27 : vector<8x64xf32>
    %29 = math.tanh %28 : vector<8x64xf32>
    %30 = arith.mulf %25, %29 : vector<8x64xf32>
    %c8 = arith.constant 8 : index
    %c0_17 = arith.constant 0 : index
    %31 = vector.load %arg7[%c8, %c0_17] : memref<64x256xf32, #tpu.memory_space<vmem>>, vector<8x256xf32>
    %c0_18 = arith.constant 0 : index
    %c0_19 = arith.constant 0 : index
    %32 = vector.load %arg2[%c0_18, %c0_19] : memref<64x256xf32, #tpu.memory_space<vmem>>, vector<64x256xf32>
    %cst_20 = arith.constant dense<0.000000e+00> : vector<8x256xf32>
    %33 = tpu.matmul %30, %32, %cst_20 {dimension_numbers = #tpu.dot_dimension_numbers<[1], [0], [0], [1], [0, 0, 1, 1], [], []>} : vector<8x64xf32>, vector<64x256xf32>, vector<8x256xf32> -> vector<8x256xf32>
    %34 = arith.addf %31, %33 : vector<8x256xf32>
    %35 = arith.negf %34 : vector<8x256xf32>
    %36 = math.exp %35 : vector<8x256xf32>
    %cst_21 = arith.constant 1.000000e+00 : f32
    %37 = vector.broadcast %cst_21 : f32 to vector<8x256xf32>
    %38 = arith.addf %37, %36 : vector<8x256xf32>
    %39 = arith.divf %37, %38 : vector<8x256xf32>
    %40 = vector.extract_strided_slice %39 {offsets = [0, 0], sizes = [8, 64], strides = [1, 1]} : vector<8x256xf32> to vector<8x64xf32>
    %41 = vector.extract_strided_slice %39 {offsets = [0, 64], sizes = [8, 64], strides = [1, 1]} : vector<8x256xf32> to vector<8x64xf32>
    %42 = vector.extract_strided_slice %39 {offsets = [0, 128], sizes = [8, 64], strides = [1, 1]} : vector<8x256xf32> to vector<8x64xf32>
    %cst_22 = arith.constant 2.000000e+00 : f32
    %43 = vector.broadcast %cst_22 : f32 to vector<8x64xf32>
    %44 = arith.mulf %43, %42 : vector<8x64xf32>
    %cst_23 = arith.constant 1.000000e+00 : f32
    %45 = vector.broadcast %cst_23 : f32 to vector<8x64xf32>
    %46 = arith.subf %44, %45 : vector<8x64xf32>
    %47 = vector.extract_strided_slice %39 {offsets = [0, 192], sizes = [8, 64], strides = [1, 1]} : vector<8x256xf32> to vector<8x64xf32>
    %48 = arith.mulf %41, %28 : vector<8x64xf32>
    %49 = arith.mulf %40, %46 : vector<8x64xf32>
    %50 = arith.addf %48, %49 : vector<8x64xf32>
    %51 = math.tanh %50 : vector<8x64xf32>
    %52 = arith.mulf %47, %51 : vector<8x64xf32>
    %c16 = arith.constant 16 : index
    %c0_24 = arith.constant 0 : index
    %53 = vector.load %arg7[%c16, %c0_24] : memref<64x256xf32, #tpu.memory_space<vmem>>, vector<8x256xf32>
    %c0_25 = arith.constant 0 : index
    %c0_26 = arith.constant 0 : index
    %54 = vector.load %arg2[%c0_25, %c0_26] : memref<64x256xf32, #tpu.memory_space<vmem>>, vector<64x256xf32>
    %cst_27 = arith.constant dense<0.000000e+00> : vector<8x256xf32>
    %55 = tpu.matmul %52, %54, %cst_27 {dimension_numbers = #tpu.dot_dimension_numbers<[1], [0], [0], [1], [0, 0, 1, 1], [], []>} : vector<8x64xf32>, vector<64x256xf32>, vector<8x256xf32> -> vector<8x256xf32>
    %56 = arith.addf %53, %55 : vector<8x256xf32>
    %57 = arith.negf %56 : vector<8x256xf32>
    %58 = math.exp %57 : vector<8x256xf32>
    %cst_28 = arith.constant 1.000000e+00 : f32
    %59 = vector.broadcast %cst_28 : f32 to vector<8x256xf32>
    %60 = arith.addf %59, %58 : vector<8x256xf32>
    %61 = arith.divf %59, %60 : vector<8x256xf32>
    %62 = vector.extract_strided_slice %61 {offsets = [0, 0], sizes = [8, 64], strides = [1, 1]} : vector<8x256xf32> to vector<8x64xf32>
    %63 = vector.extract_strided_slice %61 {offsets = [0, 64], sizes = [8, 64], strides = [1, 1]} : vector<8x256xf32> to vector<8x64xf32>
    %64 = vector.extract_strided_slice %61 {offsets = [0, 128], sizes = [8, 64], strides = [1, 1]} : vector<8x256xf32> to vector<8x64xf32>
    %cst_29 = arith.constant 2.000000e+00 : f32
    %65 = vector.broadcast %cst_29 : f32 to vector<8x64xf32>
    %66 = arith.mulf %65, %64 : vector<8x64xf32>
    %cst_30 = arith.constant 1.000000e+00 : f32
    %67 = vector.broadcast %cst_30 : f32 to vector<8x64xf32>
    %68 = arith.subf %66, %67 : vector<8x64xf32>
    %69 = vector.extract_strided_slice %61 {offsets = [0, 192], sizes = [8, 64], strides = [1, 1]} : vector<8x256xf32> to vector<8x64xf32>
    %70 = arith.mulf %63, %50 : vector<8x64xf32>
    %71 = arith.mulf %62, %68 : vector<8x64xf32>
    %72 = arith.addf %70, %71 : vector<8x64xf32>
    %73 = math.tanh %72 : vector<8x64xf32>
    %74 = arith.mulf %69, %73 : vector<8x64xf32>
    %c24 = arith.constant 24 : index
    %c0_31 = arith.constant 0 : index
    %75 = vector.load %arg7[%c24, %c0_31] : memref<64x256xf32, #tpu.memory_space<vmem>>, vector<8x256xf32>
    %c0_32 = arith.constant 0 : index
    %c0_33 = arith.constant 0 : index
    %76 = vector.load %arg2[%c0_32, %c0_33] : memref<64x256xf32, #tpu.memory_space<vmem>>, vector<64x256xf32>
    %cst_34 = arith.constant dense<0.000000e+00> : vector<8x256xf32>
    %77 = tpu.matmul %74, %76, %cst_34 {dimension_numbers = #tpu.dot_dimension_numbers<[1], [0], [0], [1], [0, 0, 1, 1], [], []>} : vector<8x64xf32>, vector<64x256xf32>, vector<8x256xf32> -> vector<8x256xf32>
    %78 = arith.addf %75, %77 : vector<8x256xf32>
    %79 = arith.negf %78 : vector<8x256xf32>
    %80 = math.exp %79 : vector<8x256xf32>
    %cst_35 = arith.constant 1.000000e+00 : f32
    %81 = vector.broadcast %cst_35 : f32 to vector<8x256xf32>
    %82 = arith.addf %81, %80 : vector<8x256xf32>
    %83 = arith.divf %81, %82 : vector<8x256xf32>
    %84 = vector.extract_strided_slice %83 {offsets = [0, 0], sizes = [8, 64], strides = [1, 1]} : vector<8x256xf32> to vector<8x64xf32>
    %85 = vector.extract_strided_slice %83 {offsets = [0, 64], sizes = [8, 64], strides = [1, 1]} : vector<8x256xf32> to vector<8x64xf32>
    %86 = vector.extract_strided_slice %83 {offsets = [0, 128], sizes = [8, 64], strides = [1, 1]} : vector<8x256xf32> to vector<8x64xf32>
    %cst_36 = arith.constant 2.000000e+00 : f32
    %87 = vector.broadcast %cst_36 : f32 to vector<8x64xf32>
    %88 = arith.mulf %87, %86 : vector<8x64xf32>
    %cst_37 = arith.constant 1.000000e+00 : f32
    %89 = vector.broadcast %cst_37 : f32 to vector<8x64xf32>
    %90 = arith.subf %88, %89 : vector<8x64xf32>
    %91 = vector.extract_strided_slice %83 {offsets = [0, 192], sizes = [8, 64], strides = [1, 1]} : vector<8x256xf32> to vector<8x64xf32>
    %92 = arith.mulf %85, %72 : vector<8x64xf32>
    %93 = arith.mulf %84, %90 : vector<8x64xf32>
    %94 = arith.addf %92, %93 : vector<8x64xf32>
    %95 = math.tanh %94 : vector<8x64xf32>
    %96 = arith.mulf %91, %95 : vector<8x64xf32>
    %c32 = arith.constant 32 : index
    %c0_38 = arith.constant 0 : index
    %97 = vector.load %arg7[%c32, %c0_38] : memref<64x256xf32, #tpu.memory_space<vmem>>, vector<8x256xf32>
    %c0_39 = arith.constant 0 : index
    %c0_40 = arith.constant 0 : index
    %98 = vector.load %arg2[%c0_39, %c0_40] : memref<64x256xf32, #tpu.memory_space<vmem>>, vector<64x256xf32>
    %cst_41 = arith.constant dense<0.000000e+00> : vector<8x256xf32>
    %99 = tpu.matmul %96, %98, %cst_41 {dimension_numbers = #tpu.dot_dimension_numbers<[1], [0], [0], [1], [0, 0, 1, 1], [], []>} : vector<8x64xf32>, vector<64x256xf32>, vector<8x256xf32> -> vector<8x256xf32>
    %100 = arith.addf %97, %99 : vector<8x256xf32>
    %101 = arith.negf %100 : vector<8x256xf32>
    %102 = math.exp %101 : vector<8x256xf32>
    %cst_42 = arith.constant 1.000000e+00 : f32
    %103 = vector.broadcast %cst_42 : f32 to vector<8x256xf32>
    %104 = arith.addf %103, %102 : vector<8x256xf32>
    %105 = arith.divf %103, %104 : vector<8x256xf32>
    %106 = vector.extract_strided_slice %105 {offsets = [0, 0], sizes = [8, 64], strides = [1, 1]} : vector<8x256xf32> to vector<8x64xf32>
    %107 = vector.extract_strided_slice %105 {offsets = [0, 64], sizes = [8, 64], strides = [1, 1]} : vector<8x256xf32> to vector<8x64xf32>
    %108 = vector.extract_strided_slice %105 {offsets = [0, 128], sizes = [8, 64], strides = [1, 1]} : vector<8x256xf32> to vector<8x64xf32>
    %cst_43 = arith.constant 2.000000e+00 : f32
    %109 = vector.broadcast %cst_43 : f32 to vector<8x64xf32>
    %110 = arith.mulf %109, %108 : vector<8x64xf32>
    %cst_44 = arith.constant 1.000000e+00 : f32
    %111 = vector.broadcast %cst_44 : f32 to vector<8x64xf32>
    %112 = arith.subf %110, %111 : vector<8x64xf32>
    %113 = vector.extract_strided_slice %105 {offsets = [0, 192], sizes = [8, 64], strides = [1, 1]} : vector<8x256xf32> to vector<8x64xf32>
    %114 = arith.mulf %107, %94 : vector<8x64xf32>
    %115 = arith.mulf %106, %112 : vector<8x64xf32>
    %116 = arith.addf %114, %115 : vector<8x64xf32>
    %117 = math.tanh %116 : vector<8x64xf32>
    %118 = arith.mulf %113, %117 : vector<8x64xf32>
    %c40 = arith.constant 40 : index
    %c0_45 = arith.constant 0 : index
    %119 = vector.load %arg7[%c40, %c0_45] : memref<64x256xf32, #tpu.memory_space<vmem>>, vector<8x256xf32>
    %c0_46 = arith.constant 0 : index
    %c0_47 = arith.constant 0 : index
    %120 = vector.load %arg2[%c0_46, %c0_47] : memref<64x256xf32, #tpu.memory_space<vmem>>, vector<64x256xf32>
    %cst_48 = arith.constant dense<0.000000e+00> : vector<8x256xf32>
    %121 = tpu.matmul %118, %120, %cst_48 {dimension_numbers = #tpu.dot_dimension_numbers<[1], [0], [0], [1], [0, 0, 1, 1], [], []>} : vector<8x64xf32>, vector<64x256xf32>, vector<8x256xf32> -> vector<8x256xf32>
    %122 = arith.addf %119, %121 : vector<8x256xf32>
    %123 = arith.negf %122 : vector<8x256xf32>
    %124 = math.exp %123 : vector<8x256xf32>
    %cst_49 = arith.constant 1.000000e+00 : f32
    %125 = vector.broadcast %cst_49 : f32 to vector<8x256xf32>
    %126 = arith.addf %125, %124 : vector<8x256xf32>
    %127 = arith.divf %125, %126 : vector<8x256xf32>
    %128 = vector.extract_strided_slice %127 {offsets = [0, 0], sizes = [8, 64], strides = [1, 1]} : vector<8x256xf32> to vector<8x64xf32>
    %129 = vector.extract_strided_slice %127 {offsets = [0, 64], sizes = [8, 64], strides = [1, 1]} : vector<8x256xf32> to vector<8x64xf32>
    %130 = vector.extract_strided_slice %127 {offsets = [0, 128], sizes = [8, 64], strides = [1, 1]} : vector<8x256xf32> to vector<8x64xf32>
    %cst_50 = arith.constant 2.000000e+00 : f32
    %131 = vector.broadcast %cst_50 : f32 to vector<8x64xf32>
    %132 = arith.mulf %131, %130 : vector<8x64xf32>
    %cst_51 = arith.constant 1.000000e+00 : f32
    %133 = vector.broadcast %cst_51 : f32 to vector<8x64xf32>
    %134 = arith.subf %132, %133 : vector<8x64xf32>
    %135 = vector.extract_strided_slice %127 {offsets = [0, 192], sizes = [8, 64], strides = [1, 1]} : vector<8x256xf32> to vector<8x64xf32>
    %136 = arith.mulf %129, %116 : vector<8x64xf32>
    %137 = arith.mulf %128, %134 : vector<8x64xf32>
    %138 = arith.addf %136, %137 : vector<8x64xf32>
    %139 = math.tanh %138 : vector<8x64xf32>
    %140 = arith.mulf %135, %139 : vector<8x64xf32>
    %c48 = arith.constant 48 : index
    %c0_52 = arith.constant 0 : index
    %141 = vector.load %arg7[%c48, %c0_52] : memref<64x256xf32, #tpu.memory_space<vmem>>, vector<8x256xf32>
    %c0_53 = arith.constant 0 : index
    %c0_54 = arith.constant 0 : index
    %142 = vector.load %arg2[%c0_53, %c0_54] : memref<64x256xf32, #tpu.memory_space<vmem>>, vector<64x256xf32>
    %cst_55 = arith.constant dense<0.000000e+00> : vector<8x256xf32>
    %143 = tpu.matmul %140, %142, %cst_55 {dimension_numbers = #tpu.dot_dimension_numbers<[1], [0], [0], [1], [0, 0, 1, 1], [], []>} : vector<8x64xf32>, vector<64x256xf32>, vector<8x256xf32> -> vector<8x256xf32>
    %144 = arith.addf %141, %143 : vector<8x256xf32>
    %145 = arith.negf %144 : vector<8x256xf32>
    %146 = math.exp %145 : vector<8x256xf32>
    %cst_56 = arith.constant 1.000000e+00 : f32
    %147 = vector.broadcast %cst_56 : f32 to vector<8x256xf32>
    %148 = arith.addf %147, %146 : vector<8x256xf32>
    %149 = arith.divf %147, %148 : vector<8x256xf32>
    %150 = vector.extract_strided_slice %149 {offsets = [0, 0], sizes = [8, 64], strides = [1, 1]} : vector<8x256xf32> to vector<8x64xf32>
    %151 = vector.extract_strided_slice %149 {offsets = [0, 64], sizes = [8, 64], strides = [1, 1]} : vector<8x256xf32> to vector<8x64xf32>
    %152 = vector.extract_strided_slice %149 {offsets = [0, 128], sizes = [8, 64], strides = [1, 1]} : vector<8x256xf32> to vector<8x64xf32>
    %cst_57 = arith.constant 2.000000e+00 : f32
    %153 = vector.broadcast %cst_57 : f32 to vector<8x64xf32>
    %154 = arith.mulf %153, %152 : vector<8x64xf32>
    %cst_58 = arith.constant 1.000000e+00 : f32
    %155 = vector.broadcast %cst_58 : f32 to vector<8x64xf32>
    %156 = arith.subf %154, %155 : vector<8x64xf32>
    %157 = vector.extract_strided_slice %149 {offsets = [0, 192], sizes = [8, 64], strides = [1, 1]} : vector<8x256xf32> to vector<8x64xf32>
    %158 = arith.mulf %151, %138 : vector<8x64xf32>
    %159 = arith.mulf %150, %156 : vector<8x64xf32>
    %160 = arith.addf %158, %159 : vector<8x64xf32>
    %161 = math.tanh %160 : vector<8x64xf32>
    %162 = arith.mulf %157, %161 : vector<8x64xf32>
    %c56 = arith.constant 56 : index
    %c0_59 = arith.constant 0 : index
    %163 = vector.load %arg7[%c56, %c0_59] : memref<64x256xf32, #tpu.memory_space<vmem>>, vector<8x256xf32>
    %c0_60 = arith.constant 0 : index
    %c0_61 = arith.constant 0 : index
    %164 = vector.load %arg2[%c0_60, %c0_61] : memref<64x256xf32, #tpu.memory_space<vmem>>, vector<64x256xf32>
    %cst_62 = arith.constant dense<0.000000e+00> : vector<8x256xf32>
    %165 = tpu.matmul %162, %164, %cst_62 {dimension_numbers = #tpu.dot_dimension_numbers<[1], [0], [0], [1], [0, 0, 1, 1], [], []>} : vector<8x64xf32>, vector<64x256xf32>, vector<8x256xf32> -> vector<8x256xf32>
    %166 = arith.addf %163, %165 : vector<8x256xf32>
    %167 = arith.negf %166 : vector<8x256xf32>
    %168 = math.exp %167 : vector<8x256xf32>
    %cst_63 = arith.constant 1.000000e+00 : f32
    %169 = vector.broadcast %cst_63 : f32 to vector<8x256xf32>
    %170 = arith.addf %169, %168 : vector<8x256xf32>
    %171 = arith.divf %169, %170 : vector<8x256xf32>
    %172 = vector.extract_strided_slice %171 {offsets = [0, 0], sizes = [8, 64], strides = [1, 1]} : vector<8x256xf32> to vector<8x64xf32>
    %173 = vector.extract_strided_slice %171 {offsets = [0, 64], sizes = [8, 64], strides = [1, 1]} : vector<8x256xf32> to vector<8x64xf32>
    %174 = vector.extract_strided_slice %171 {offsets = [0, 128], sizes = [8, 64], strides = [1, 1]} : vector<8x256xf32> to vector<8x64xf32>
    %cst_64 = arith.constant 2.000000e+00 : f32
    %175 = vector.broadcast %cst_64 : f32 to vector<8x64xf32>
    %176 = arith.mulf %175, %174 : vector<8x64xf32>
    %cst_65 = arith.constant 1.000000e+00 : f32
    %177 = vector.broadcast %cst_65 : f32 to vector<8x64xf32>
    %178 = arith.subf %176, %177 : vector<8x64xf32>
    %179 = vector.extract_strided_slice %171 {offsets = [0, 192], sizes = [8, 64], strides = [1, 1]} : vector<8x256xf32> to vector<8x64xf32>
    %180 = arith.mulf %173, %160 : vector<8x64xf32>
    %181 = arith.mulf %172, %178 : vector<8x64xf32>
    %182 = arith.addf %180, %181 : vector<8x64xf32>
    %183 = math.tanh %182 : vector<8x64xf32>
    %184 = arith.mulf %179, %183 : vector<8x64xf32>
    %c0_66 = arith.constant 0 : index
    %c0_67 = arith.constant 0 : index
    %185 = vector.load %arg4[%c0_66, %c0_67] : memref<64x6xf32, #tpu.memory_space<vmem>>, vector<64x6xf32>
    %cst_68 = arith.constant dense<0.000000e+00> : vector<8x6xf32>
    %186 = tpu.matmul %184, %185, %cst_68 {dimension_numbers = #tpu.dot_dimension_numbers<[1], [0], [0], [1], [0, 0, 1, 1], [], []>} : vector<8x64xf32>, vector<64x6xf32>, vector<8x6xf32> -> vector<8x6xf32>
    %c0_69 = arith.constant 0 : index
    %c0_70 = arith.constant 0 : index
    %187 = vector.load %arg5[%c0_69, %c0_70] : memref<1x6xf32, #tpu.memory_space<vmem>>, vector<1x6xf32>
    %188 = vector.broadcast %187 : vector<1x6xf32> to vector<8x6xf32>
    %189 = arith.addf %186, %188 : vector<8x6xf32>
    %c0_71 = arith.constant 0 : index
    %c0_72 = arith.constant 0 : index
    %190 = vector.load %arg6[%c0_71, %c0_72] : memref<8x6xf32, #tpu.memory_space<vmem>>, vector<8x6xf32>
    tpu.vector_store %arg6[%c0_71, %c0_72], %189 {strides = array<i32>} : memref<8x6xf32, #tpu.memory_space<vmem>>, vector<8x6xf32>,
    return
  }
}

</mosaic_0001>

<llo_original>
// kernel: mul.17
$region0: #{mul.17}
  #allocation0 [shape = 's32[1]{0}', space=sflag, size = 0x4, scoped, tag = 'scoped memory for mul.17']
  %s0 = inlined_call_operand.vmem [shape: f32[1,256], index: 0, kind: input, shape index: {}]
  %s1 = inlined_call_operand.vmem [shape: f32[1,256], index: 1, kind: input, shape index: {}]
  %s2 = inlined_call_operand.vmem [shape: f32[1,256], index: 2, kind: output, shape index: {}]
  %v3 = vld [vmem:[%s0] sm:$0x1]
  %v4 = vld [vmem:[%s1] sm:$0x1]
  %5 = xla_tuple %v3, %v4
  %6 = xla_tuple %5
  %v7 = vmul.f32 %v3, %v4
  %8 = xla_tuple %v7
  %9 = vst [vmem:[%s2] sm:$0x1] %v7
  %s10 = scalar_lea.vmem %s0, 1
  %v11 = vld [vmem:[%s10] sm:$0x1]
  %s12 = scalar_lea.vmem %s1, 1
  %v13 = vld [vmem:[%s12] sm:$0x1]
  %14 = xla_tuple %v11, %v13
  %15 = xla_tuple %14
  %v16 = vmul.f32 %v11, %v13
  %17 = xla_tuple %v16
  %s18 = scalar_lea.vmem %s2, 1
  %19 = vst [vmem:[%s18] sm:$0x1] %v16

// kernel: lstm_model_forward.1
$region0: #{lstm_model_forward.1}
  #allocation0 [shape = 'u32[]', space=smem, size = 0x4, offset = 0x4, fixed_abs, tag = 'smem constant byte address 0x4 - core index']
  #allocation1 [shape = 'u32[144,128]{1,0:T(1,128)}', space=vmem, size = 0x12000, scoped, tag = 'internal scratch']
  #allocation2 [shape = 'f32[64,256]{1,0:T(8,128)}', space=vmem, size = 0x10000, scoped, tag = 'scratch operand']
  %s0 = inlined_call_operand.vmem [shape: f32[64,6], index: 0, kind: input, shape index: {}]
  %s1 = inlined_call_operand.vmem [shape: f32[6,256], index: 1, kind: input, shape index: {}]
  %s2 = inlined_call_operand.vmem [shape: f32[64,256], index: 2, kind: input, shape index: {}]
  %s3 = inlined_call_operand.vmem [shape: f32[1,256], index: 3, kind: input, shape index: {}]
  %s4 = inlined_call_operand.vmem [shape: f32[64,6], index: 4, kind: input, shape index: {}]
  %s5 = inlined_call_operand.vmem [shape: f32[1,6], index: 5, kind: input, shape index: {}]
  %s6 = inlined_call_operand.vmem [shape: f32[8,6], index: 6, kind: output, shape index: {}]
  %s7 = sld [smem:[#allocation0]]
  $region34: #{lstm_model_forward.1} parent=0
    _
  %s9 = ssub.s32 1, %s7
  %s10 = scalar_select 0, %s9, %s7
  // Predicated region
  $region2: #{lstm_model_forward.1} parent=0 // pred_check
    _
  $region3: #{lstm_model_forward.1} parent=0 // pred_check_branch
    %12 = sbr.rel (0) target = $region5
  $region4: #{lstm_model_forward.1} parent=0 // pred_region
    _
  $region5: #{lstm_model_forward.1} parent=0 // pred_fallthru
    _
  // Predicated region
  $region6: #{lstm_model_forward.1} parent=0 // pred_check
    _
  $region7: #{lstm_model_forward.1} parent=0 // pred_check_branch
    %14 = sbr.rel (0) target = $region9
  $region8: #{lstm_model_forward.1} parent=0 // pred_region
    _
  $region9: #{lstm_model_forward.1} parent=0 // pred_fallthru
    _
  // Predicated region
  $region10: #{lstm_model_forward.1} parent=0 // pred_check
    _
  $region11: #{lstm_model_forward.1} parent=0 // pred_check_branch
    %16 = sbr.rel (0) target = $region13
  $region12: #{lstm_model_forward.1} parent=0 // pred_region
    _
  $region13: #{lstm_model_forward.1} parent=0 // pred_fallthru
    _
  // Predicated region
  $region14: #{lstm_model_forward.1} parent=0 // pred_check
    _
  $region15: #{lstm_model_forward.1} parent=0 // pred_check_branch
    %18 = sbr.rel (0) target = $region17
  $region16: #{lstm_model_forward.1} parent=0 // pred_region
    _
  $region17: #{lstm_model_forward.1} parent=0 // pred_fallthru
    _
  // Predicated region
  $region18: #{lstm_model_forward.1} parent=0 // pred_check
    _
  $region19: #{lstm_model_forward.1} parent=0 // pred_check_branch
    %20 = sbr.rel (0) target = $region21
  $region20: #{lstm_model_forward.1} parent=0 // pred_region
    _
  $region21: #{lstm_model_forward.1} parent=0 // pred_fallthru
    _
  // Predicated region
  $region22: #{lstm_model_forward.1} parent=0 // pred_check
    _
  $region23: #{lstm_model_forward.1} parent=0 // pred_check_branch
    %22 = sbr.rel (0) target = $region25
  $region24: #{lstm_model_forward.1} parent=0 // pred_region
    _
  $region25: #{lstm_model_forward.1} parent=0 // pred_fallthru
    _
  %v23 = vld [vmem:[%s0] sm:$0xff]
  %v24 = vld [vmem:[%s0 + $0x8] sm:$0xff]
  %v25 = vld [vmem:[%s0 + $0x10] sm:$0xff]
  %v26 = vld [vmem:[%s0 + $0x18] sm:$0xff]
  %v27 = vld [vmem:[%s0 + $0x20] sm:$0xff]
  %v28 = vld [vmem:[%s0 + $0x28] sm:$0xff]
  %v29 = vld [vmem:[%s0 + $0x30] sm:$0xff]
  %v30 = vld [vmem:[%s0 + $0x38] sm:$0xff]
  %v31 = vld [vmem:[%s1] sm:$0x3f]
  %v32 = vld [vmem:[%s1 + $0x8] sm:$0x3f]
  %v33 = vld [vmem:[%s3] sm:$0x3]
  %v35 = vlaneseq
  %v36 = vshrl.u32 %v35, 7
  %v37 = vsub.s32 0, %v36
  %v38 = vrot.slane %v33, %v37
  %v39 = vlaneseq
  %v40 = vshrl.u32 %v39, 7
  %v41 = vsub.s32 1, %v40
  %v42 = vrot.slane %v33, %v41
  %vm45 = vcmask 48128
  %v47 = vsel %vm45, %v23, 0
  %v50 = vsel %vm45, %v24, 0
  %v53 = vsel %vm45, %v25, 0
  %v56 = vsel %vm45, %v26, 0
  %v59 = vsel %vm45, %v27, 0
  %v62 = vsel %vm45, %v28, 0
  %v65 = vsel %vm45, %v29, 0
  %v68 = vsel %vm45, %v30, 0
  %vm70 = vcmask 1045504
  %v72 = vsel %vm70, %v31, 0
  %v75 = vsel %vm70, %v32, 0
  %77 = vmatprep.subr.mxu0 %v75
  %78 = vmatpush1.msra.mxu0 %v72
  %79 = vmatprep.subr.mxu0 0.0
  %80 = vmatpush1.msra.mxu0 0.0
  %81 = vmatprep.subr.mxu0 0.0
  %82 = vmatpush1.msra.mxu0 0.0
  %83 = vmatprep.subr.mxu0 0.0
  %84 = vmatpush1.msra.mxu0 0.0
  %85 = vmatprep.subr.mxu0 0.0
  %86 = vmatpush1.msra.mxu0 0.0
  %87 = vmatprep.subr.mxu0 0.0
  %88 = vmatpush1.msra.mxu0 0.0
  %89 = vmatprep.subr.mxu0 0.0
  %90 = vmatpush1.msra.mxu0 0.0
  %91 = vmatprep.subr.mxu0 0.0
  %92 = vmatpush1.msra.mxu0 0.0
  %93 = vmatprep.subr.mxu0 0.0
  %94 = vmatpush1.msra.mxu0 0.0
  %95 = vmatprep.subr.mxu0 0.0
  %96 = vmatpush1.msra.mxu0 0.0
  %97 = vmatprep.subr.mxu0 0.0
  %98 = vmatpush1.msra.mxu0 0.0
  %99 = vmatprep.subr.mxu0 0.0
  %100 = vmatpush1.msra.mxu0 0.0
  %101 = vmatprep.subr.mxu0 0.0
  %102 = vmatpush1.msra.mxu0 0.0
  %103 = vmatprep.subr.mxu0 0.0
  %104 = vmatpush1.msra.mxu0 0.0
  %105 = vmatprep.subr.mxu0 0.0
  %106 = vmatpush1.msra.mxu0 0.0
  %107 = vmatprep.subr.mxu0 0.0
  %108 = vmatpush1.msra.mxu0 0.0
  %109 = vmatprep.subr.mxu0 0.0
  %110 = vmatpush1.msra.mxu0 0.0
  %111 = vmatprep.subr.mxu0 0.0
  %112 = vmatpush1.msra.mxu0 0.0
  %113 = vmatprep.subr.mxu0 0.0
  %114 = vmatpush1.msra.mxu0 0.0
  %115 = vmatprep.subr.mxu0 0.0
  %116 = vmatpush1.msra.mxu0 0.0
  %117 = vmatprep.subr.mxu0 0.0
  %118 = vmatpush1.msra.mxu0 0.0
  %119 = vmatprep.subr.mxu0 0.0
  %120 = vmatpush1.msra.mxu0 0.0
  %121 = vmatprep.subr.mxu0 0.0
  %122 = vmatpush1.msra.mxu0 0.0
  %123 = vmatprep.subr.mxu0 0.0
  %124 = vmatpush1.msra.mxu0 0.0
  %125 = vmatprep.subr.mxu0 0.0
  %126 = vmatpush1.msra.mxu0 0.0
  %127 = vmatprep.subr.mxu0 0.0
  %128 = vmatpush1.msra.mxu0 0.0
  %129 = vmatprep.subr.mxu0 0.0
  %130 = vmatpush1.msra.mxu0 0.0
  %131 = vmatprep.subr.mxu0 0.0
  %132 = vmatpush1.msra.mxu0 0.0
  %133 = vmatprep.subr.mxu0 0.0
  %134 = vmatpush1.msra.mxu0 0.0
  %135 = vmatprep.subr.mxu0 0.0
  %136 = vmatpush1.msra.mxu0 0.0
  %137 = vmatprep.subr.mxu0 0.0
  %138 = vmatpush1.msra.mxu0 0.0
  %139 = vmatprep.subr.mxu0 0.0
  %140 = vmatpush1.msra.mxu0 0.0
  %141 = vmatprep.mubr.f32.mxu0 0.0
  %142 = vmatmul.mubr.f32.gmra.mrb[0].mxu0 %v47
  %v143 = vpop.f32.mrb[0].mxu0
  %v144 = vadd.f32 %v38, %v143
  %v145 = vpop.f32.mrb[0].mxu0
  %v146 = vadd.f32 %v42, %v145
  %147 = vmatprep.mubr.f32.mxu0 0.0
  %148 = vmatmul.mubr.f32.gmra.mrb[0].mxu0 %v50
  %v149 = vpop.f32.mrb[0].mxu0
  %v150 = vadd.f32 %v38, %v149
  %v151 = vpop.f32.mrb[0].mxu0
  %v152 = vadd.f32 %v42, %v151
  %153 = vmatprep.mubr.f32.mxu0 0.0
  %154 = vmatmul.mubr.f32.gmra.mrb[0].mxu0 %v53
  %v155 = vpop.f32.mrb[0].mxu0
  %v156 = vadd.f32 %v38, %v155
  %v157 = vpop.f32.mrb[0].mxu0
  %v158 = vadd.f32 %v42, %v157
  %159 = vmatprep.mubr.f32.mxu0 0.0
  %160 = vmatmul.mubr.f32.gmra.mrb[0].mxu0 %v56
  %v161 = vpop.f32.mrb[0].mxu0
  %v162 = vadd.f32 %v38, %v161
  %v163 = vpop.f32.mrb[0].mxu0
  %v164 = vadd.f32 %v42, %v163
  %165 = vmatprep.mubr.f32.mxu0 0.0
  %166 = vmatmul.mubr.f32.gmra.mrb[0].mxu0 %v59
  %v167 = vpop.f32.mrb[0].mxu0
  %v168 = vadd.f32 %v38, %v167
  %v169 = vpop.f32.mrb[0].mxu0
  %v170 = vadd.f32 %v42, %v169
  %171 = vmatprep.mubr.f32.mxu0 0.0
  %172 = vmatmul.mubr.f32.gmra.mrb[0].mxu0 %v62
  %v173 = vpop.f32.mrb[0].mxu0
  %v174 = vadd.f32 %v38, %v173
  %v175 = vpop.f32.mrb[0].mxu0
  %v176 = vadd.f32 %v42, %v175
  %177 = vmatprep.mubr.f32.mxu0 0.0
  %178 = vmatmul.mubr.f32.gmra.mrb[0].mxu0 %v65
  %v179 = vpop.f32.mrb[0].mxu0
  %v180 = vadd.f32 %v38, %v179
  %v181 = vpop.f32.mrb[0].mxu0
  %v182 = vadd.f32 %v42, %v181
  %183 = vmatprep.mubr.f32.mxu0 0.0
  %184 = vmatmul.mubr.f32.gmra.mrb[0].mxu0 %v68
  %v185 = vpop.f32.mrb[0].mxu0
  %v186 = vadd.f32 %v38, %v185
  %v187 = vpop.f32.mrb[0].mxu0
  %v188 = vadd.f32 %v42, %v187
  %189 = vdwg.mxu0
  %190 = vst [vmem:[#allocation2] sm:$0xff] %v144
  %191 = vst [vmem:[#allocation2 + $0x8] sm:$0xff] %v146
  %192 = vst [vmem:[#allocation2 + $0x10] sm:$0xff] %v150
  %193 = vst [vmem:[#allocation2 + $0x18] sm:$0xff] %v152
  %194 = vst [vmem:[#allocation2 + $0x20] sm:$0xff] %v156
  %195 = vst [vmem:[#allocation2 + $0x28] sm:$0xff] %v158
  %196 = vst [vmem:[#allocation2 + $0x30] sm:$0xff] %v162
  %197 = vst [vmem:[#allocation2 + $0x38] sm:$0xff] %v164
  %198 = vst [vmem:[#allocation2 + $0x40] sm:$0xff] %v168
  %199 = vst [vmem:[#allocation2 + $0x48] sm:$0xff] %v170
  %200 = vst [vmem:[#allocation2 + $0x50] sm:$0xff] %v174
  %201 = vst [vmem:[#allocation2 + $0x58] sm:$0xff] %v176
  %202 = vst [vmem:[#allocation2 + $0x60] sm:$0xff] %v180
  %203 = vst [vmem:[#allocation2 + $0x68] sm:$0xff] %v182
  %204 = vst [vmem:[#allocation2 + $0x70] sm:$0xff] %v186
  %205 = vst [vmem:[#allocation2 + $0x78] sm:$0xff] %v188
  %v206 = vld [vmem:[#allocation2] sm:$0xff]
  %v207 = vld [vmem:[#allocation2 + $0x8] sm:$0xff]
  %v208 = vld [vmem:[%s2] sm:$0xff]
  %v209 = vld [vmem:[%s2 + $0x8] sm:$0xff]
  %v210 = vld [vmem:[%s2 + $0x10] sm:$0xff]
  %v211 = vld [vmem:[%s2 + $0x18] sm:$0xff]
  %v212 = vld [vmem:[%s2 + $0x20] sm:$0xff]
  %v213 = vld [vmem:[%s2 + $0x28] sm:$0xff]
  %v214 = vld [vmem:[%s2 + $0x30] sm:$0xff]
  %v215 = vld [vmem:[%s2 + $0x38] sm:$0xff]
  %v216 = vld [vmem:[%s2 + $0x40] sm:$0xff]
  %v217 = vld [vmem:[%s2 + $0x48] sm:$0xff]
  %v218 = vld [vmem:[%s2 + $0x50] sm:$0xff]
  %v219 = vld [vmem:[%s2 + $0x58] sm:$0xff]
  %v220 = vld [vmem:[%s2 + $0x60] sm:$0xff]
  %v221 = vld [vmem:[%s2 + $0x68] sm:$0xff]
  %v222 = vld [vmem:[%s2 + $0x70] sm:$0xff]
  %v223 = vld [vmem:[%s2 + $0x78] sm:$0xff]
  %vm224 = vcmask 523264
  %v226 = vsel %vm224, 0.0, 0
  %228 = vmatprep.subr.mxu0 %v209
  %229 = vmatpush1.msra.mxu0 %v208
  %230 = vmatprep.subr.mxu0 %v211
  %231 = vmatpush1.msra.mxu0 %v210
  %232 = vmatprep.subr.mxu0 %v213
  %233 = vmatpush1.msra.mxu0 %v212
  %234 = vmatprep.subr.mxu0 %v215
  %235 = vmatpush1.msra.mxu0 %v214
  %236 = vmatprep.subr.mxu0 %v217
  %237 = vmatpush1.msra.mxu0 %v216
  %238 = vmatprep.subr.mxu0 %v219
  %239 = vmatpush1.msra.mxu0 %v218
  %240 = vmatprep.subr.mxu0 %v221
  %241 = vmatpush1.msra.mxu0 %v220
  %242 = vmatprep.subr.mxu0 %v223
  %243 = vmatpush1.msra.mxu0 %v222
  %244 = vmatprep.subr.mxu0 0.0
  %245 = vmatpush1.msra.mxu0 0.0
  %246 = vmatprep.subr.mxu0 0.0
  %247 = vmatpush1.msra.mxu0 0.0
  %248 = vmatprep.subr.mxu0 0.0
  %249 = vmatpush1.msra.mxu0 0.0
  %250 = vmatprep.subr.mxu0 0.0
  %251 = vmatpush1.msra.mxu0 0.0
  %252 = vmatprep.subr.mxu0 0.0
  %253 = vmatpush1.msra.mxu0 0.0
  %254 = vmatprep.subr.mxu0 0.0
  %255 = vmatpush1.msra.mxu0 0.0
  %256 = vmatprep.subr.mxu0 0.0
  %257 = vmatpush1.msra.mxu0 0.0
  %258 = vmatprep.subr.mxu0 0.0
  %259 = vmatpush1.msra.mxu0 0.0
  %260 = vmatprep.subr.mxu0 0.0
  %261 = vmatpush1.msra.mxu0 0.0
  %262 = vmatprep.subr.mxu0 0.0
  %263 = vmatpush1.msra.mxu0 0.0
  %264 = vmatprep.subr.mxu0 0.0
  %265 = vmatpush1.msra.mxu0 0.0
  %266 = vmatprep.subr.mxu0 0.0
  %267 = vmatpush1.msra.mxu0 0.0
  %268 = vmatprep.subr.mxu0 0.0
  %269 = vmatpush1.msra.mxu0 0.0
  %270 = vmatprep.subr.mxu0 0.0
  %271 = vmatpush1.msra.mxu0 0.0
  %272 = vmatprep.subr.mxu0 0.0
  %273 = vmatpush1.msra.mxu0 0.0
  %274 = vmatprep.subr.mxu0 0.0
  %275 = vmatpush1.msra.mxu0 0.0
  %276 = vmatprep.subr.mxu0 0.0
  %277 = vmatpush1.msra.mxu0 0.0
  %278 = vmatprep.subr.mxu0 0.0
  %279 = vmatpush1.msra.mxu0 0.0
  %280 = vmatprep.subr.mxu0 0.0
  %281 = vmatpush1.msra.mxu0 0.0
  %282 = vmatprep.subr.mxu0 0.0
  %283 = vmatpush1.msra.mxu0 0.0
  %284 = vmatprep.subr.mxu0 0.0
  %285 = vmatpush1.msra.mxu0 0.0
  %286 = vmatprep.subr.mxu0 0.0
  %287 = vmatpush1.msra.mxu0 0.0
  %288 = vmatprep.subr.mxu0 0.0
  %289 = vmatpush1.msra.mxu0 0.0
  %290 = vmatprep.subr.mxu0 0.0
  %291 = vmatpush1.msra.mxu0 0.0
  %292 = vmatprep.mubr.f32.mxu0 0.0
  %293 = vmatmul.mubr.f32.gmra.mrb[0].mxu0 %v226
  %v294 = vpop.f32.mrb[0].mxu0
  %v295 = vadd.f32 0.0, %v294
  %v296 = vpop.f32.mrb[0].mxu0
  %v297 = vadd.f32 0.0, %v296
  %298 = vdwg.mxu0
  %v299 = vadd.f32 %v206, %v295
  %v300 = vadd.f32 %v207, %v297
  %v301 = vxor.u32 %v299, 2147483648
  %v302 = vxor.u32 %v300, 2147483648
  %v303 = vmul.f32 %v301, 1.442695
  %v304 = vpow.pop %v303
  %v305 = vmul.f32 %v302, 1.442695
  %v306 = vpow.pop %v305
  %v307 = vadd.f32 %v304, 1.0
  %v308 = vadd.f32 %v306, 1.0
  %v309 = vrcp.pop %v307
  %v310 = vmul.f32 1.0, %v309
  %v311 = vrcp.pop %v308
  %v312 = vmul.f32 1.0, %v311
  %v313 = vmul.f32 %v312, 2.0
  %v314 = vsub.f32 %v313, 1.0
  %v315 = vmul.f32 %v310, 0.0
  %v316 = vmul.f32 %v310, %v314
  %318 = vrot.lane.b32.xlu0 %v316, 64
  %v319 = vpop.permute.xlu0 %318
  %v321 = vadd.f32 %v315, %v319
  %v322 = vtanh.pop %v321
  %v323 = vmul.f32 %v312, %v322
  %v324 = vld [vmem:[#allocation2 + $0x10] sm:$0xff]
  %v325 = vld [vmem:[#allocation2 + $0x18] sm:$0xff]
  %327 = vrot.lane.b32.xlu0 %v323, 64
  %v328 = vpop.permute.xlu0 %327
  %v329 = vsel %vm224, %v328, 0
  %331 = vmatprep.subr.mxu0 %v209
  %332 = vmatpush1.msra.mxu0 %v208
  %333 = vmatprep.subr.mxu0 %v211
  %334 = vmatpush1.msra.mxu0 %v210
  %335 = vmatprep.subr.mxu0 %v213
  %336 = vmatpush1.msra.mxu0 %v212
  %337 = vmatprep.subr.mxu0 %v215
  %338 = vmatpush1.msra.mxu0 %v214
  %339 = vmatprep.subr.mxu0 %v217
  %340 = vmatpush1.msra.mxu0 %v216
  %341 = vmatprep.subr.mxu0 %v219
  %342 = vmatpush1.msra.mxu0 %v218
  %343 = vmatprep.subr.mxu0 %v221
  %344 = vmatpush1.msra.mxu0 %v220
  %345 = vmatprep.subr.mxu0 %v223
  %346 = vmatpush1.msra.mxu0 %v222
  %347 = vmatprep.subr.mxu0 0.0
  %348 = vmatpush1.msra.mxu0 0.0
  %349 = vmatprep.subr.mxu0 0.0
  %350 = vmatpush1.msra.mxu0 0.0
  %351 = vmatprep.subr.mxu0 0.0
  %352 = vmatpush1.msra.mxu0 0.0
  %353 = vmatprep.subr.mxu0 0.0
  %354 = vmatpush1.msra.mxu0 0.0
  %355 = vmatprep.subr.mxu0 0.0
  %356 = vmatpush1.msra.mxu0 0.0
  %357 = vmatprep.subr.mxu0 0.0
  %358 = vmatpush1.msra.mxu0 0.0
  %359 = vmatprep.subr.mxu0 0.0
  %360 = vmatpush1.msra.mxu0 0.0
  %361 = vmatprep.subr.mxu0 0.0
  %362 = vmatpush1.msra.mxu0 0.0
  %363 = vmatprep.subr.mxu0 0.0
  %364 = vmatpush1.msra.mxu0 0.0
  %365 = vmatprep.subr.mxu0 0.0
  %366 = vmatpush1.msra.mxu0 0.0
  %367 = vmatprep.subr.mxu0 0.0
  %368 = vmatpush1.msra.mxu0 0.0
  %369 = vmatprep.subr.mxu0 0.0
  %370 = vmatpush1.msra.mxu0 0.0
  %371 = vmatprep.subr.mxu0 0.0
  %372 = vmatpush1.msra.mxu0 0.0
  %373 = vmatprep.subr.mxu0 0.0
  %374 = vmatpush1.msra.mxu0 0.0
  %375 = vmatprep.subr.mxu0 0.0
  %376 = vmatpush1.msra.mxu0 0.0
  %377 = vmatprep.subr.mxu0 0.0
  %378 = vmatpush1.msra.mxu0 0.0
  %379 = vmatprep.subr.mxu0 0.0
  %380 = vmatpush1.msra.mxu0 0.0
  %381 = vmatprep.subr.mxu0 0.0
  %382 = vmatpush1.msra.mxu0 0.0
  %383 = vmatprep.subr.mxu0 0.0
  %384 = vmatpush1.msra.mxu0 0.0
  %385 = vmatprep.subr.mxu0 0.0
  %386 = vmatpush1.msra.mxu0 0.0
  %387 = vmatprep.subr.mxu0 0.0
  %388 = vmatpush1.msra.mxu0 0.0
  %389 = vmatprep.subr.mxu0 0.0
  %390 = vmatpush1.msra.mxu0 0.0
  %391 = vmatprep.subr.mxu0 0.0
  %392 = vmatpush1.msra.mxu0 0.0
  %393 = vmatprep.subr.mxu0 0.0
  %394 = vmatpush1.msra.mxu0 0.0
  %395 = vmatprep.mubr.f32.mxu0 0.0
  %396 = vmatmul.mubr.f32.gmra.mrb[0].mxu0 %v329
  %v397 = vpop.f32.mrb[0].mxu0
  %v398 = vadd.f32 0.0, %v397
  %v399 = vpop.f32.mrb[0].mxu0
  %v400 = vadd.f32 0.0, %v399
  %401 = vdwg.mxu0
  %v402 = vadd.f32 %v324, %v398
  %v403 = vadd.f32 %v325, %v400
  %v404 = vxor.u32 %v402, 2147483648
  %v405 = vxor.u32 %v403, 2147483648
  %v406 = vmul.f32 %v404, 1.442695
  %v407 = vpow.pop %v406
  %v408 = vmul.f32 %v405, 1.442695
  %v409 = vpow.pop %v408
  %v410 = vadd.f32 %v407, 1.0
  %v411 = vadd.f32 %v409, 1.0
  %v412 = vrcp.pop %v410
  %v413 = vmul.f32 1.0, %v412
  %v414 = vrcp.pop %v411
  %v415 = vmul.f32 1.0, %v414
  %v416 = vmul.f32 %v415, 2.0
  %v417 = vsub.f32 %v416, 1.0
  %v418 = vmul.f32 %v413, %v321
  %v419 = vmul.f32 %v413, %v417
  %421 = vrot.lane.b32.xlu0 %v419, 64
  %v422 = vpop.permute.xlu0 %421
  %v424 = vadd.f32 %v418, %v422
  %v425 = vtanh.pop %v424
  %v426 = vmul.f32 %v415, %v425
  %v427 = vld [vmem:[#allocation2 + $0x20] sm:$0xff]
  %v428 = vld [vmem:[#allocation2 + $0x28] sm:$0xff]
  %430 = vrot.lane.b32.xlu0 %v426, 64
  %v431 = vpop.permute.xlu0 %430
  %v432 = vsel %vm224, %v431, 0
  %434 = vmatprep.subr.mxu0 %v209
  %435 = vmatpush1.msra.mxu0 %v208
  %436 = vmatprep.subr.mxu0 %v211
  %437 = vmatpush1.msra.mxu0 %v210
  %438 = vmatprep.subr.mxu0 %v213
  %439 = vmatpush1.msra.mxu0 %v212
  %440 = vmatprep.subr.mxu0 %v215
  %441 = vmatpush1.msra.mxu0 %v214
  %442 = vmatprep.subr.mxu0 %v217
  %443 = vmatpush1.msra.mxu0 %v216
  %444 = vmatprep.subr.mxu0 %v219
  %445 = vmatpush1.msra.mxu0 %v218
  %446 = vmatprep.subr.mxu0 %v221
  %447 = vmatpush1.msra.mxu0 %v220
  %448 = vmatprep.subr.mxu0 %v223
  %449 = vmatpush1.msra.mxu0 %v222
  %450 = vmatprep.subr.mxu0 0.0
  %451 = vmatpush1.msra.mxu0 0.0
  %452 = vmatprep.subr.mxu0 0.0
  %453 = vmatpush1.msra.mxu0 0.0
  %454 = vmatprep.subr.mxu0 0.0
  %455 = vmatpush1.msra.mxu0 0.0
  %456 = vmatprep.subr.mxu0 0.0
  %457 = vmatpush1.msra.mxu0 0.0
  %458 = vmatprep.subr.mxu0 0.0
  %459 = vmatpush1.msra.mxu0 0.0
  %460 = vmatprep.subr.mxu0 0.0
  %461 = vmatpush1.msra.mxu0 0.0
  %462 = vmatprep.subr.mxu0 0.0
  %463 = vmatpush1.msra.mxu0 0.0
  %464 = vmatprep.subr.mxu0 0.0
  %465 = vmatpush1.msra.mxu0 0.0
  %466 = vmatprep.subr.mxu0 0.0
  %467 = vmatpush1.msra.mxu0 0.0
  %468 = vmatprep.subr.mxu0 0.0
  %469 = vmatpush1.msra.mxu0 0.0
  %470 = vmatprep.subr.mxu0 0.0
  %471 = vmatpush1.msra.mxu0 0.0
  %472 = vmatprep.subr.mxu0 0.0
  %473 = vmatpush1.msra.mxu0 0.0
  %474 = vmatprep.subr.mxu0 0.0
  %475 = vmatpush1.msra.mxu0 0.0
  %476 = vmatprep.subr.mxu0 0.0
  %477 = vmatpush1.msra.mxu0 0.0
  %478 = vmatprep.subr.mxu0 0.0
  %479 = vmatpush1.msra.mxu0 0.0
  %480 = vmatprep.subr.mxu0 0.0
  %481 = vmatpush1.msra.mxu0 0.0
  %482 = vmatprep.subr.mxu0 0.0
  %483 = vmatpush1.msra.mxu0 0.0
  %484 = vmatprep.subr.mxu0 0.0
  %485 = vmatpush1.msra.mxu0 0.0
  %486 = vmatprep.subr.mxu0 0.0
  %487 = vmatpush1.msra.mxu0 0.0
  %488 = vmatprep.subr.mxu0 0.0
  %489 = vmatpush1.msra.mxu0 0.0
  %490 = vmatprep.subr.mxu0 0.0
  %491 = vmatpush1.msra.mxu0 0.0
  %492 = vmatprep.subr.mxu0 0.0
  %493 = vmatpush1.msra.mxu0 0.0
  %494 = vmatprep.subr.mxu0 0.0
  %495 = vmatpush1.msra.mxu0 0.0
  %496 = vmatprep.subr.mxu0 0.0
  %497 = vmatpush1.msra.mxu0 0.0
  %498 = vmatprep.mubr.f32.mxu0 0.0
  %499 = vmatmul.mubr.f32.gmra.mrb[0].mxu0 %v432
  %v500 = vpop.f32.mrb[0].mxu0
  %v501 = vadd.f32 0.0, %v500
  %v502 = vpop.f32.mrb[0].mxu0
  %v503 = vadd.f32 0.0, %v502
  %504 = vdwg.mxu0
  %v505 = vadd.f32 %v427, %v501
  %v506 = vadd.f32 %v428, %v503
  %v507 = vxor.u32 %v505, 2147483648
  %v508 = vxor.u32 %v506, 2147483648
  %v509 = vmul.f32 %v507, 1.442695
  %v510 = vpow.pop %v509
  %v511 = vmul.f32 %v508, 1.442695
  %v512 = vpow.pop %v511
  %v513 = vadd.f32 %v510, 1.0
  %v514 = vadd.f32 %v512, 1.0
  %v515 = vrcp.pop %v513
  %v516 = vmul.f32 1.0, %v515
  %v517 = vrcp.pop %v514
  %v518 = vmul.f32 1.0, %v517
  %v519 = vmul.f32 %v518, 2.0
  %v520 = vsub.f32 %v519, 1.0
  %v521 = vmul.f32 %v516, %v424
  %v522 = vmul.f32 %v516, %v520
  %524 = vrot.lane.b32.xlu0 %v522, 64
  %v525 = vpop.permute.xlu0 %524
  %v527 = vadd.f32 %v521, %v525
  %v528 = vtanh.pop %v527
  %v529 = vmul.f32 %v518, %v528
  %v530 = vld [vmem:[#allocation2 + $0x30] sm:$0xff]
  %v531 = vld [vmem:[#allocation2 + $0x38] sm:$0xff]
  %533 = vrot.lane.b32.xlu0 %v529, 64
  %v534 = vpop.permute.xlu0 %533
  %v535 = vsel %vm224, %v534, 0
  %537 = vmatprep.subr.mxu0 %v209
  %538 = vmatpush1.msra.mxu0 %v208
  %539 = vmatprep.subr.mxu0 %v211
  %540 = vmatpush1.msra.mxu0 %v210
  %541 = vmatprep.subr.mxu0 %v213
  %542 = vmatpush1.msra.mxu0 %v212
  %543 = vmatprep.subr.mxu0 %v215
  %544 = vmatpush1.msra.mxu0 %v214
  %545 = vmatprep.subr.mxu0 %v217
  %546 = vmatpush1.msra.mxu0 %v216
  %547 = vmatprep.subr.mxu0 %v219
  %548 = vmatpush1.msra.mxu0 %v218
  %549 = vmatprep.subr.mxu0 %v221
  %550 = vmatpush1.msra.mxu0 %v220
  %551 = vmatprep.subr.mxu0 %v223
  %552 = vmatpush1.msra.mxu0 %v222
  %553 = vmatprep.subr.mxu0 0.0
  %554 = vmatpush1.msra.mxu0 0.0
  %555 = vmatprep.subr.mxu0 0.0
  %556 = vmatpush1.msra.mxu0 0.0
  %557 = vmatprep.subr.mxu0 0.0
  %558 = vmatpush1.msra.mxu0 0.0
  %559 = vmatprep.subr.mxu0 0.0
  %560 = vmatpush1.msra.mxu0 0.0
  %561 = vmatprep.subr.mxu0 0.0
  %562 = vmatpush1.msra.mxu0 0.0
  %563 = vmatprep.subr.mxu0 0.0
  %564 = vmatpush1.msra.mxu0 0.0
  %565 = vmatprep.subr.mxu0 0.0
  %566 = vmatpush1.msra.mxu0 0.0
  %567 = vmatprep.subr.mxu0 0.0
  %568 = vmatpush1.msra.mxu0 0.0
  %569 = vmatprep.subr.mxu0 0.0
  %570 = vmatpush1.msra.mxu0 0.0
  %571 = vmatprep.subr.mxu0 0.0
  %572 = vmatpush1.msra.mxu0 0.0
  %573 = vmatprep.subr.mxu0 0.0
  %574 = vmatpush1.msra.mxu0 0.0
  %575 = vmatprep.subr.mxu0 0.0
  %576 = vmatpush1.msra.mxu0 0.0
  %577 = vmatprep.subr.mxu0 0.0
  %578 = vmatpush1.msra.mxu0 0.0
  %579 = vmatprep.subr.mxu0 0.0
  %580 = vmatpush1.msra.mxu0 0.0
  %581 = vmatprep.subr.mxu0 0.0
  %582 = vmatpush1.msra.mxu0 0.0
  %583 = vmatprep.subr.mxu0 0.0
  %584 = vmatpush1.msra.mxu0 0.0
  %585 = vmatprep.subr.mxu0 0.0
  %586 = vmatpush1.msra.mxu0 0.0
  %587 = vmatprep.subr.mxu0 0.0
  %588 = vmatpush1.msra.mxu0 0.0
  %589 = vmatprep.subr.mxu0 0.0
  %590 = vmatpush1.msra.mxu0 0.0
  %591 = vmatprep.subr.mxu0 0.0
  %592 = vmatpush1.msra.mxu0 0.0
  %593 = vmatprep.subr.mxu0 0.0
  %594 = vmatpush1.msra.mxu0 0.0
  %595 = vmatprep.subr.mxu0 0.0
  %596 = vmatpush1.msra.mxu0 0.0
  %597 = vmatprep.subr.mxu0 0.0
  %598 = vmatpush1.msra.mxu0 0.0
  %599 = vmatprep.subr.mxu0 0.0
  %600 = vmatpush1.msra.mxu0 0.0
  %601 = vmatprep.mubr.f32.mxu0 0.0
  %602 = vmatmul.mubr.f32.gmra.mrb[0].mxu0 %v535
  %v603 = vpop.f32.mrb[0].mxu0
  %v604 = vadd.f32 0.0, %v603
  %v605 = vpop.f32.mrb[0].mxu0
  %v606 = vadd.f32 0.0, %v605
  %607 = vdwg.mxu0
  %v608 = vadd.f32 %v530, %v604
  %v609 = vadd.f32 %v531, %v606
  %v610 = vxor.u32 %v608, 2147483648
  %v611 = vxor.u32 %v609, 2147483648
  %v612 = vmul.f32 %v610, 1.442695
  %v613 = vpow.pop %v612
  %v614 = vmul.f32 %v611, 1.442695
  %v615 = vpow.pop %v614
  %v616 = vadd.f32 %v613, 1.0
  %v617 = vadd.f32 %v615, 1.0
  %v618 = vrcp.pop %v616
  %v619 = vmul.f32 1.0, %v618
  %v620 = vrcp.pop %v617
  %v621 = vmul.f32 1.0, %v620
  %v622 = vmul.f32 %v621, 2.0
  %v623 = vsub.f32 %v622, 1.0
  %v624 = vmul.f32 %v619, %v527
  %v625 = vmul.f32 %v619, %v623
  %627 = vrot.lane.b32.xlu0 %v625, 64
  %v628 = vpop.permute.xlu0 %627
  %v630 = vadd.f32 %v624, %v628
  %v631 = vtanh.pop %v630
  %v632 = vmul.f32 %v621, %v631
  %v633 = vld [vmem:[#allocation2 + $0x40] sm:$0xff]
  %v634 = vld [vmem:[#allocation2 + $0x48] sm:$0xff]
  %636 = vrot.lane.b32.xlu0 %v632, 64
  %v637 = vpop.permute.xlu0 %636
  %v638 = vsel %vm224, %v637, 0
  %640 = vmatprep.subr.mxu0 %v209
  %641 = vmatpush1.msra.mxu0 %v208
  %642 = vmatprep.subr.mxu0 %v211
  %643 = vmatpush1.msra.mxu0 %v210
  %644 = vmatprep.subr.mxu0 %v213
  %645 = vmatpush1.msra.mxu0 %v212
  %646 = vmatprep.subr.mxu0 %v215
  %647 = vmatpush1.msra.mxu0 %v214
  %648 = vmatprep.subr.mxu0 %v217
  %649 = vmatpush1.msra.mxu0 %v216
  %650 = vmatprep.subr.mxu0 %v219
  %651 = vmatpush1.msra.mxu0 %v218
  %652 = vmatprep.subr.mxu0 %v221
  %653 = vmatpush1.msra.mxu0 %v220
  %654 = vmatprep.subr.mxu0 %v223
  %655 = vmatpush1.msra.mxu0 %v222
  %656 = vmatprep.subr.mxu0 0.0
  %657 = vmatpush1.msra.mxu0 0.0
  %658 = vmatprep.subr.mxu0 0.0
  %659 = vmatpush1.msra.mxu0 0.0
  %660 = vmatprep.subr.mxu0 0.0
  %661 = vmatpush1.msra.mxu0 0.0
  %662 = vmatprep.subr.mxu0 0.0
  %663 = vmatpush1.msra.mxu0 0.0
  %664 = vmatprep.subr.mxu0 0.0
  %665 = vmatpush1.msra.mxu0 0.0
  %666 = vmatprep.subr.mxu0 0.0
  %667 = vmatpush1.msra.mxu0 0.0
  %668 = vmatprep.subr.mxu0 0.0
  %669 = vmatpush1.msra.mxu0 0.0
  %670 = vmatprep.subr.mxu0 0.0
  %671 = vmatpush1.msra.mxu0 0.0
  %672 = vmatprep.subr.mxu0 0.0
  %673 = vmatpush1.msra.mxu0 0.0
  %674 = vmatprep.subr.mxu0 0.0
  %675 = vmatpush1.msra.mxu0 0.0
  %676 = vmatprep.subr.mxu0 0.0
  %677 = vmatpush1.msra.mxu0 0.0
  %678 = vmatprep.subr.mxu0 0.0
  %679 = vmatpush1.msra.mxu0 0.0
  %680 = vmatprep.subr.mxu0 0.0
  %681 = vmatpush1.msra.mxu0 0.0
  %682 = vmatprep.subr.mxu0 0.0
  %683 = vmatpush1.msra.mxu0 0.0
  %684 = vmatprep.subr.mxu0 0.0
  %685 = vmatpush1.msra.mxu0 0.0
  %686 = vmatprep.subr.mxu0 0.0
  %687 = vmatpush1.msra.mxu0 0.0
  %688 = vmatprep.subr.mxu0 0.0
  %689 = vmatpush1.msra.mxu0 0.0
  %690 = vmatprep.subr.mxu0 0.0
  %691 = vmatpush1.msra.mxu0 0.0
  %692 = vmatprep.subr.mxu0 0.0
  %693 = vmatpush1.msra.mxu0 0.0
  %694 = vmatprep.subr.mxu0 0.0
  %695 = vmatpush1.msra.mxu0 0.0
  %696 = vmatprep.subr.mxu0 0.0
  %697 = vmatpush1.msra.mxu0 0.0
  %698 = vmatprep.subr.mxu0 0.0
  %699 = vmatpush1.msra.mxu0 0.0
  %700 = vmatprep.subr.mxu0 0.0
  %701 = vmatpush1.msra.mxu0 0.0
  %702 = vmatprep.subr.mxu0 0.0
  %703 = vmatpush1.msra.mxu0 0.0
  %704 = vmatprep.mubr.f32.mxu0 0.0
  %705 = vmatmul.mubr.f32.gmra.mrb[0].mxu0 %v638
  %v706 = vpop.f32.mrb[0].mxu0
  %v707 = vadd.f32 0.0, %v706
  %v708 = vpop.f32.mrb[0].mxu0
  %v709 = vadd.f32 0.0, %v708
  %710 = vdwg.mxu0
  %v711 = vadd.f32 %v633, %v707
  %v712 = vadd.f32 %v634, %v709
  %v713 = vxor.u32 %v711, 2147483648
  %v714 = vxor.u32 %v712, 2147483648
  %v715 = vmul.f32 %v713, 1.442695
  %v716 = vpow.pop %v715
  %v717 = vmul.f32 %v714, 1.442695
  %v718 = vpow.pop %v717
  %v719 = vadd.f32 %v716, 1.0
  %v720 = vadd.f32 %v718, 1.0
  %v721 = vrcp.pop %v719
  %v722 = vmul.f32 1.0, %v721
  %v723 = vrcp.pop %v720
  %v724 = vmul.f32 1.0, %v723
  %v725 = vmul.f32 %v724, 2.0
  %v726 = vsub.f32 %v725, 1.0
  %v727 = vmul.f32 %v722, %v630
  %v728 = vmul.f32 %v722, %v726
  %730 = vrot.lane.b32.xlu0 %v728, 64
  %v731 = vpop.permute.xlu0 %730
  %v733 = vadd.f32 %v727, %v731
  %v734 = vtanh.pop %v733
  %v735 = vmul.f32 %v724, %v734
  %v736 = vld [vmem:[#allocation2 + $0x50] sm:$0xff]
  %v737 = vld [vmem:[#allocation2 + $0x58] sm:$0xff]
  %739 = vrot.lane.b32.xlu0 %v735, 64
  %v740 = vpop.permute.xlu0 %739
  %v741 = vsel %vm224, %v740, 0
  %743 = vmatprep.subr.mxu0 %v209
  %744 = vmatpush1.msra.mxu0 %v208
  %745 = vmatprep.subr.mxu0 %v211
  %746 = vmatpush1.msra.mxu0 %v210
  %747 = vmatprep.subr.mxu0 %v213
  %748 = vmatpush1.msra.mxu0 %v212
  %749 = vmatprep.subr.mxu0 %v215
  %750 = vmatpush1.msra.mxu0 %v214
  %751 = vmatprep.subr.mxu0 %v217
  %752 = vmatpush1.msra.mxu0 %v216
  %753 = vmatprep.subr.mxu0 %v219
  %754 = vmatpush1.msra.mxu0 %v218
  %755 = vmatprep.subr.mxu0 %v221
  %756 = vmatpush1.msra.mxu0 %v220
  %757 = vmatprep.subr.mxu0 %v223
  %758 = vmatpush1.msra.mxu0 %v222
  %759 = vmatprep.subr.mxu0 0.0
  %760 = vmatpush1.msra.mxu0 0.0
  %761 = vmatprep.subr.mxu0 0.0
  %762 = vmatpush1.msra.mxu0 0.0
  %763 = vmatprep.subr.mxu0 0.0
  %764 = vmatpush1.msra.mxu0 0.0
  %765 = vmatprep.subr.mxu0 0.0
  %766 = vmatpush1.msra.mxu0 0.0
  %767 = vmatprep.subr.mxu0 0.0
  %768 = vmatpush1.msra.mxu0 0.0
  %769 = vmatprep.subr.mxu0 0.0
  %770 = vmatpush1.msra.mxu0 0.0
  %771 = vmatprep.subr.mxu0 0.0
  %772 = vmatpush1.msra.mxu0 0.0
  %773 = vmatprep.subr.mxu0 0.0
  %774 = vmatpush1.msra.mxu0 0.0
  %775 = vmatprep.subr.mxu0 0.0
  %776 = vmatpush1.msra.mxu0 0.0
  %777 = vmatprep.subr.mxu0 0.0
  %778 = vmatpush1.msra.mxu0 0.0
  %779 = vmatprep.subr.mxu0 0.0
  %780 = vmatpush1.msra.mxu0 0.0
  %781 = vmatprep.subr.mxu0 0.0
  %782 = vmatpush1.msra.mxu0 0.0
  %783 = vmatprep.subr.mxu0 0.0
  %784 = vmatpush1.msra.mxu0 0.0
  %785 = vmatprep.subr.mxu0 0.0
  %786 = vmatpush1.msra.mxu0 0.0
  %787 = vmatprep.subr.mxu0 0.0
  %788 = vmatpush1.msra.mxu0 0.0
  %789 = vmatprep.subr.mxu0 0.0
  %790 = vmatpush1.msra.mxu0 0.0
  %791 = vmatprep.subr.mxu0 0.0
  %792 = vmatpush1.msra.mxu0 0.0
  %793 = vmatprep.subr.mxu0 0.0
  %794 = vmatpush1.msra.mxu0 0.0
  %795 = vmatprep.subr.mxu0 0.0
  %796 = vmatpush1.msra.mxu0 0.0
  %797 = vmatprep.subr.mxu0 0.0
  %798 = vmatpush1.msra.mxu0 0.0
  %799 = vmatprep.subr.mxu0 0.0
  %800 = vmatpush1.msra.mxu0 0.0
  %801 = vmatprep.subr.mxu0 0.0
  %802 = vmatpush1.msra.mxu0 0.0
  %803 = vmatprep.subr.mxu0 0.0
  %804 = vmatpush1.msra.mxu0 0.0
  %805 = vmatprep.subr.mxu0 0.0
  %806 = vmatpush1.msra.mxu0 0.0
  %807 = vmatprep.mubr.f32.mxu0 0.0
  %808 = vmatmul.mubr.f32.gmra.mrb[0].mxu0 %v741
  %v809 = vpop.f32.mrb[0].mxu0
  %v810 = vadd.f32 0.0, %v809
  %v811 = vpop.f32.mrb[0].mxu0
  %v812 = vadd.f32 0.0, %v811
  %813 = vdwg.mxu0
  %v814 = vadd.f32 %v736, %v810
  %v815 = vadd.f32 %v737, %v812
  %v816 = vxor.u32 %v814, 2147483648
  %v817 = vxor.u32 %v815, 2147483648
  %v818 = vmul.f32 %v816, 1.442695
  %v819 = vpow.pop %v818
  %v820 = vmul.f32 %v817, 1.442695
  %v821 = vpow.pop %v820
  %v822 = vadd.f32 %v819, 1.0
  %v823 = vadd.f32 %v821, 1.0
  %v824 = vrcp.pop %v822
  %v825 = vmul.f32 1.0, %v824
  %v826 = vrcp.pop %v823
  %v827 = vmul.f32 1.0, %v826
  %v828 = vmul.f32 %v827, 2.0
  %v829 = vsub.f32 %v828, 1.0
  %v830 = vmul.f32 %v825, %v733
  %v831 = vmul.f32 %v825, %v829
  %833 = vrot.lane.b32.xlu0 %v831, 64
  %v834 = vpop.permute.xlu0 %833
  %v836 = vadd.f32 %v830, %v834
  %v837 = vtanh.pop %v836
  %v838 = vmul.f32 %v827, %v837
  %v839 = vld [vmem:[#allocation2 + $0x60] sm:$0xff]
  %v840 = vld [vmem:[#allocation2 + $0x68] sm:$0xff]
  %842 = vrot.lane.b32.xlu0 %v838, 64
  %v843 = vpop.permute.xlu0 %842
  %v844 = vsel %vm224, %v843, 0
  %846 = vmatprep.subr.mxu0 %v209
  %847 = vmatpush1.msra.mxu0 %v208
  %848 = vmatprep.subr.mxu0 %v211
  %849 = vmatpush1.msra.mxu0 %v210
  %850 = vmatprep.subr.mxu0 %v213
  %851 = vmatpush1.msra.mxu0 %v212
  %852 = vmatprep.subr.mxu0 %v215
  %853 = vmatpush1.msra.mxu0 %v214
  %854 = vmatprep.subr.mxu0 %v217
  %855 = vmatpush1.msra.mxu0 %v216
  %856 = vmatprep.subr.mxu0 %v219
  %857 = vmatpush1.msra.mxu0 %v218
  %858 = vmatprep.subr.mxu0 %v221
  %859 = vmatpush1.msra.mxu0 %v220
  %860 = vmatprep.subr.mxu0 %v223
  %861 = vmatpush1.msra.mxu0 %v222
  %862 = vmatprep.subr.mxu0 0.0
  %863 = vmatpush1.msra.mxu0 0.0
  %864 = vmatprep.subr.mxu0 0.0
  %865 = vmatpush1.msra.mxu0 0.0
  %866 = vmatprep.subr.mxu0 0.0
  %867 = vmatpush1.msra.mxu0 0.0
  %868 = vmatprep.subr.mxu0 0.0
  %869 = vmatpush1.msra.mxu0 0.0
  %870 = vmatprep.subr.mxu0 0.0
  %871 = vmatpush1.msra.mxu0 0.0
  %872 = vmatprep.subr.mxu0 0.0
  %873 = vmatpush1.msra.mxu0 0.0
  %874 = vmatprep.subr.mxu0 0.0
  %875 = vmatpush1.msra.mxu0 0.0
  %876 = vmatprep.subr.mxu0 0.0
  %877 = vmatpush1.msra.mxu0 0.0
  %878 = vmatprep.subr.mxu0 0.0
  %879 = vmatpush1.msra.mxu0 0.0
  %880 = vmatprep.subr.mxu0 0.0
  %881 = vmatpush1.msra.mxu0 0.0
  %882 = vmatprep.subr.mxu0 0.0
  %883 = vmatpush1.msra.mxu0 0.0
  %884 = vmatprep.subr.mxu0 0.0
  %885 = vmatpush1.msra.mxu0 0.0
  %886 = vmatprep.subr.mxu0 0.0
  %887 = vmatpush1.msra.mxu0 0.0
  %888 = vmatprep.subr.mxu0 0.0
  %889 = vmatpush1.msra.mxu0 0.0
  %890 = vmatprep.subr.mxu0 0.0
  %891 = vmatpush1.msra.mxu0 0.0
  %892 = vmatprep.subr.mxu0 0.0
  %893 = vmatpush1.msra.mxu0 0.0
  %894 = vmatprep.subr.mxu0 0.0
  %895 = vmatpush1.msra.mxu0 0.0
  %896 = vmatprep.subr.mxu0 0.0
  %897 = vmatpush1.msra.mxu0 0.0
  %898 = vmatprep.subr.mxu0 0.0
  %899 = vmatpush1.msra.mxu0 0.0
  %900 = vmatprep.subr.mxu0 0.0
  %901 = vmatpush1.msra.mxu0 0.0
  %902 = vmatprep.subr.mxu0 0.0
  %903 = vmatpush1.msra.mxu0 0.0
  %904 = vmatprep.subr.mxu0 0.0
  %905 = vmatpush1.msra.mxu0 0.0
  %906 = vmatprep.subr.mxu0 0.0
  %907 = vmatpush1.msra.mxu0 0.0
  %908 = vmatprep.subr.mxu0 0.0
  %909 = vmatpush1.msra.mxu0 0.0
  %910 = vmatprep.mubr.f32.mxu0 0.0
  %911 = vmatmul.mubr.f32.gmra.mrb[0].mxu0 %v844
  %v912 = vpop.f32.mrb[0].mxu0
  %v913 = vadd.f32 0.0, %v912
  %v914 = vpop.f32.mrb[0].mxu0
  %v915 = vadd.f32 0.0, %v914
  %916 = vdwg.mxu0
  %v917 = vadd.f32 %v839, %v913
  %v918 = vadd.f32 %v840, %v915
  %v919 = vxor.u32 %v917, 2147483648
  %v920 = vxor.u32 %v918, 2147483648
  %v921 = vmul.f32 %v919, 1.442695
  %v922 = vpow.pop %v921
  %v923 = vmul.f32 %v920, 1.442695
  %v924 = vpow.pop %v923
  %v925 = vadd.f32 %v922, 1.0
  %v926 = vadd.f32 %v924, 1.0
  %v927 = vrcp.pop %v925
  %v928 = vmul.f32 1.0, %v927
  %v929 = vrcp.pop %v926
  %v930 = vmul.f32 1.0, %v929
  %v931 = vmul.f32 %v930, 2.0
  %v932 = vsub.f32 %v931, 1.0
  %v933 = vmul.f32 %v928, %v836
  %v934 = vmul.f32 %v928, %v932
  %936 = vrot.lane.b32.xlu0 %v934, 64
  %v937 = vpop.permute.xlu0 %936
  %v939 = vadd.f32 %v933, %v937
  %v940 = vtanh.pop %v939
  %v941 = vmul.f32 %v930, %v940
  %v942 = vld [vmem:[#allocation2 + $0x70] sm:$0xff]
  %v943 = vld [vmem:[#allocation2 + $0x78] sm:$0xff]
  %945 = vrot.lane.b32.xlu0 %v941, 64
  %v946 = vpop.permute.xlu0 %945
  %v947 = vsel %vm224, %v946, 0
  %949 = vmatprep.subr.mxu0 %v209
  %950 = vmatpush1.msra.mxu0 %v208
  %951 = vmatprep.subr.mxu0 %v211
  %952 = vmatpush1.msra.mxu0 %v210
  %953 = vmatprep.subr.mxu0 %v213
  %954 = vmatpush1.msra.mxu0 %v212
  %955 = vmatprep.subr.mxu0 %v215
  %956 = vmatpush1.msra.mxu0 %v214
  %957 = vmatprep.subr.mxu0 %v217
  %958 = vmatpush1.msra.mxu0 %v216
  %959 = vmatprep.subr.mxu0 %v219
  %960 = vmatpush1.msra.mxu0 %v218
  %961 = vmatprep.subr.mxu0 %v221
  %962 = vmatpush1.msra.mxu0 %v220
  %963 = vmatprep.subr.mxu0 %v223
  %964 = vmatpush1.msra.mxu0 %v222
  %965 = vmatprep.subr.mxu0 0.0
  %966 = vmatpush1.msra.mxu0 0.0
  %967 = vmatprep.subr.mxu0 0.0
  %968 = vmatpush1.msra.mxu0 0.0
  %969 = vmatprep.subr.mxu0 0.0
  %970 = vmatpush1.msra.mxu0 0.0
  %971 = vmatprep.subr.mxu0 0.0
  %972 = vmatpush1.msra.mxu0 0.0
  %973 = vmatprep.subr.mxu0 0.0
  %974 = vmatpush1.msra.mxu0 0.0
  %975 = vmatprep.subr.mxu0 0.0
  %976 = vmatpush1.msra.mxu0 0.0
  %977 = vmatprep.subr.mxu0 0.0
  %978 = vmatpush1.msra.mxu0 0.0
  %979 = vmatprep.subr.mxu0 0.0
  %980 = vmatpush1.msra.mxu0 0.0
  %981 = vmatprep.subr.mxu0 0.0
  %982 = vmatpush1.msra.mxu0 0.0
  %983 = vmatprep.subr.mxu0 0.0
  %984 = vmatpush1.msra.mxu0 0.0
  %985 = vmatprep.subr.mxu0 0.0
  %986 = vmatpush1.msra.mxu0 0.0
  %987 = vmatprep.subr.mxu0 0.0
  %988 = vmatpush1.msra.mxu0 0.0
  %989 = vmatprep.subr.mxu0 0.0
  %990 = vmatpush1.msra.mxu0 0.0
  %991 = vmatprep.subr.mxu0 0.0
  %992 = vmatpush1.msra.mxu0 0.0
  %993 = vmatprep.subr.mxu0 0.0
  %994 = vmatpush1.msra.mxu0 0.0
  %995 = vmatprep.subr.mxu0 0.0
  %996 = vmatpush1.msra.mxu0 0.0
  %997 = vmatprep.subr.mxu0 0.0
  %998 = vmatpush1.msra.mxu0 0.0
  %999 = vmatprep.subr.mxu0 0.0
  %1000 = vmatpush1.msra.mxu0 0.0
  %1001 = vmatprep.subr.mxu0 0.0
  %1002 = vmatpush1.msra.mxu0 0.0
  %1003 = vmatprep.subr.mxu0 0.0
  %1004 = vmatpush1.msra.mxu0 0.0
  %1005 = vmatprep.subr.mxu0 0.0
  %1006 = vmatpush1.msra.mxu0 0.0
  %1007 = vmatprep.subr.mxu0 0.0
  %1008 = vmatpush1.msra.mxu0 0.0
  %1009 = vmatprep.subr.mxu0 0.0
  %1010 = vmatpush1.msra.mxu0 0.0
  %1011 = vmatprep.subr.mxu0 0.0
  %1012 = vmatpush1.msra.mxu0 0.0
  %1013 = vmatprep.mubr.f32.mxu0 0.0
  %1014 = vmatmul.mubr.f32.gmra.mrb[0].mxu0 %v947
  %v1015 = vpop.f32.mrb[0].mxu0
  %v1016 = vadd.f32 0.0, %v1015
  %v1017 = vpop.f32.mrb[0].mxu0
  %v1018 = vadd.f32 0.0, %v1017
  %1019 = vdwg.mxu0
  %v1020 = vadd.f32 %v942, %v1016
  %v1021 = vadd.f32 %v943, %v1018
  %v1022 = vxor.u32 %v1020, 2147483648
  %v1023 = vxor.u32 %v1021, 2147483648
  %v1024 = vmul.f32 %v1022, 1.442695
  %v1025 = vpow.pop %v1024
  %v1026 = vmul.f32 %v1023, 1.442695
  %v1027 = vpow.pop %v1026
  %v1028 = vadd.f32 %v1025, 1.0
  %v1029 = vadd.f32 %v1027, 1.0
  %v1030 = vrcp.pop %v1028
  %v1031 = vmul.f32 1.0, %v1030
  %v1032 = vrcp.pop %v1029
  %v1033 = vmul.f32 1.0, %v1032
  %v1034 = vmul.f32 %v1033, 2.0
  %v1035 = vsub.f32 %v1034, 1.0
  %v1036 = vmul.f32 %v1031, %v939
  %v1037 = vmul.f32 %v1031, %v1035
  %1039 = vrot.lane.b32.xlu0 %v1037, 64
  %v1040 = vpop.permute.xlu0 %1039
  %v1042 = vadd.f32 %v1036, %v1040
  %v1043 = vtanh.pop %v1042
  %v1044 = vmul.f32 %v1033, %v1043
  %v1045 = vld [vmem:[%s4] sm:$0xff]
  %v1046 = vld [vmem:[%s4 + $0x8] sm:$0xff]
  %v1047 = vld [vmem:[%s4 + $0x10] sm:$0xff]
  %v1048 = vld [vmem:[%s4 + $0x18] sm:$0xff]
  %v1049 = vld [vmem:[%s4 + $0x20] sm:$0xff]
  %v1050 = vld [vmem:[%s4 + $0x28] sm:$0xff]
  %v1051 = vld [vmem:[%s4 + $0x30] sm:$0xff]
  %v1052 = vld [vmem:[%s4 + $0x38] sm:$0xff]
  %v1053 = vld [vmem:[%s5] sm:$0x1]
  %v1055 = vlaneseq
  %v1056 = vshrl.u32 %v1055, 7
  %v1057 = vsub.s32 0, %v1056
  %v1058 = vrot.slane %v1053, %v1057
  %1061 = vrot.lane.b32.xlu0 %v1044, 64
  %v1062 = vpop.permute.xlu0 %1061
  %v1063 = vsel %vm224, %v1062, 0
  %1065 = vmatprep.subr.mxu0 0.0
  %1066 = vmatpush1.msra.mxu0 %v1045
  %1067 = vmatprep.subr.mxu0 0.0
  %1068 = vmatpush1.msra.mxu0 %v1046
  %1069 = vmatprep.subr.mxu0 0.0
  %1070 = vmatpush1.msra.mxu0 %v1047
  %1071 = vmatprep.subr.mxu0 0.0
  %1072 = vmatpush1.msra.mxu0 %v1048
  %1073 = vmatprep.subr.mxu0 0.0
  %1074 = vmatpush1.msra.mxu0 %v1049
  %1075 = vmatprep.subr.mxu0 0.0
  %1076 = vmatpush1.msra.mxu0 %v1050
  %1077 = vmatprep.subr.mxu0 0.0
  %1078 = vmatpush1.msra.mxu0 %v1051
  %1079 = vmatprep.subr.mxu0 0.0
  %1080 = vmatpush1.msra.mxu0 %v1052
  %1081 = vmatprep.subr.mxu0 0.0
  %1082 = vmatpush1.msra.mxu0 0.0
  %1083 = vmatprep.subr.mxu0 0.0
  %1084 = vmatpush1.msra.mxu0 0.0
  %1085 = vmatprep.subr.mxu0 0.0
  %1086 = vmatpush1.msra.mxu0 0.0
  %1087 = vmatprep.subr.mxu0 0.0
  %1088 = vmatpush1.msra.mxu0 0.0
  %1089 = vmatprep.subr.mxu0 0.0
  %1090 = vmatpush1.msra.mxu0 0.0
  %1091 = vmatprep.subr.mxu0 0.0
  %1092 = vmatpush1.msra.mxu0 0.0
  %1093 = vmatprep.subr.mxu0 0.0
  %1094 = vmatpush1.msra.mxu0 0.0
  %1095 = vmatprep.subr.mxu0 0.0
  %1096 = vmatpush1.msra.mxu0 0.0
  %1097 = vmatprep.subr.mxu0 0.0
  %1098 = vmatpush1.msra.mxu0 0.0
  %1099 = vmatprep.subr.mxu0 0.0
  %1100 = vmatpush1.msra.mxu0 0.0
  %1101 = vmatprep.subr.mxu0 0.0
  %1102 = vmatpush1.msra.mxu0 0.0
  %1103 = vmatprep.subr.mxu0 0.0
  %1104 = vmatpush1.msra.mxu0 0.0
  %1105 = vmatprep.subr.mxu0 0.0
  %1106 = vmatpush1.msra.mxu0 0.0
  %1107 = vmatprep.subr.mxu0 0.0
  %1108 = vmatpush1.msra.mxu0 0.0
  %1109 = vmatprep.subr.mxu0 0.0
  %1110 = vmatpush1.msra.mxu0 0.0
  %1111 = vmatprep.subr.mxu0 0.0
  %1112 = vmatpush1.msra.mxu0 0.0
  %1113 = vmatprep.subr.mxu0 0.0
  %1114 = vmatpush1.msra.mxu0 0.0
  %1115 = vmatprep.subr.mxu0 0.0
  %1116 = vmatpush1.msra.mxu0 0.0
  %1117 = vmatprep.subr.mxu0 0.0
  %1118 = vmatpush1.msra.mxu0 0.0
  %1119 = vmatprep.subr.mxu0 0.0
  %1120 = vmatpush1.msra.mxu0 0.0
  %1121 = vmatprep.subr.mxu0 0.0
  %1122 = vmatpush1.msra.mxu0 0.0
  %1123 = vmatprep.subr.mxu0 0.0
  %1124 = vmatpush1.msra.mxu0 0.0
  %1125 = vmatprep.subr.mxu0 0.0
  %1126 = vmatpush1.msra.mxu0 0.0
  %1127 = vmatprep.subr.mxu0 0.0
  %1128 = vmatpush1.msra.mxu0 0.0
  %1129 = vmatprep.mubr.f32.mxu0 0.0
  %1130 = vmatmul.mubr.f32.gmra.mrb[0].mxu0 %v1063
  %v1131 = vpop.f32.mrb[0].mxu0
  %v1132 = vadd.f32 %v1058, %v1131
  %v1133 = vpop.f32.mrb[0].mxu0
  %1134 = vdwg.mxu0
  %1135 = vst.msk [vmem:[%s6] sm:$0xff] %vm45, %v1132
  // Predicated region
  $region26: #{lstm_model_forward.1} parent=0 // pred_check
    _
  $region27: #{lstm_model_forward.1} parent=0 // pred_check_branch
    %1137 = sbr.rel (0) target = $region29
  $region28: #{lstm_model_forward.1} parent=0 // pred_region
    _
  $region29: #{lstm_model_forward.1} parent=0 // pred_fallthru
    _
  // Predicated region
  $region30: #{lstm_model_forward.1} parent=0 // pred_check
    _
  $region31: #{lstm_model_forward.1} parent=0 // pred_check_branch
    %1139 = sbr.rel (0) target = $region33
  $region32: #{lstm_model_forward.1} parent=0 // pred_region
    _
  $region33: #{lstm_model_forward.1} parent=0 // pred_fallthru
    _

</llo_original>
